<compile_context>
chip_gen: v7x
topology: tpu7x:2x2x1
jax: 0.10.0
libtpu: 0.0.40
codegen_flags: <defaults>
</compile_context>

<pallas_src>
import math

import jax
import jax.numpy as jnp
from jax.experimental import pallas as pl
from jax.experimental.pallas import tpu as pltpu


def sage_block_kernel(a_ref, xk_ref, xrow_ref, invdeg_ref, wl_ref, wr_ref,
                      b_ref, o_ref, agg_ref):
    # a_ref:      (TN, TK) int8 0/1 adjacency tile (rows = target nodes)
    # xk_ref:     (TK, D)  bf16 K-tile of node features (aggregation operand)
    # xrow_ref:   (TN, D)  f32 this M-tile's own node features (root term)
    # invdeg_ref: (TN, 1)  f32 per-row 1/max(deg,1)
    # wl_ref:     (D, HP)  f32 neighbor weight (lin_l, transposed, H padded)
    # wr_ref:     (D, HP)  f32 root weight (lin_r, transposed, H padded)
    # b_ref:      (1, HP)  f32 lin_l bias (padded)
    # o_ref:      (TN, HP) f32 lane-dense output tile
    # agg_ref:    (TN, D)  f32 VMEM accumulator for the neighbor-sum
    k = pl.program_id(1)

    @pl.when(k == 0)
    def _init():
        agg_ref[...] = jnp.zeros_like(agg_ref)

    # Native bf16 x bf16 MXU matmul (int8 0/1 -> bf16 upcast is exact and is
    # free filler under the DMA of the A stream); accumulate in f32.
    agg_ref[...] += jnp.dot(a_ref[...].astype(jnp.bfloat16), xk_ref[...],
                            preferred_element_type=jnp.float32)

    @pl.when(k == pl.num_programs(1) - 1)
    def _finalize():
        # Exact mean: per-row 1/deg applied in f32 on the accumulated sum.
        mean = agg_ref[...] * invdeg_ref[...]
        h = jnp.dot(mean, wl_ref[...], preferred_element_type=jnp.float32)
        h += jnp.dot(xrow_ref[...], wr_ref[...], preferred_element_type=jnp.float32)
        h += b_ref[...]
        # ReLU; TODO(synk): training-mode dropout would build a keep-mask here
        # via pltpu.prng_seed / pltpu.prng_random_bits (identity in eval mode).
        o_ref[...] = jnp.maximum(h, 0.0).astype(o_ref.dtype)


def graph_sage_block(x, edge_index, w_l, w_r, b_l, *, tile_n=256, tile_k=512):
    """x: (N, D) float32, edge_index: (2, E) int32 [src; dst]. Returns (N, H)."""
    N, D = x.shape
    H = w_l.shape[1]

    # Pad the node dimension so both grid axes tile evenly, and H to a
    # lane-dense multiple of 128 (unmasked vector stores).
    step = math.lcm(tile_n, tile_k)
    n_pad = ((N + step - 1) // step) * step
    h_pad = ((H + 127) // 128) * 128

    src, dst = edge_index[0], edge_index[1]
    # 0/1 adjacency built ONCE, directly at padded shape, in int8 (dominant HBM
    # operand -> 1 byte/entry). Degrees via an O(E) scatter, kept in f32.
    # TODO(synk): the dense adjacency is O(N^2); the scalable formulation is
    # CSR + PrefetchScalarGridSpec row gather so traffic scales with E*D.
    a_p = jnp.zeros((n_pad, n_pad), jnp.int8).at[dst, src].add(1)
    deg = jnp.zeros((n_pad,), jnp.float32).at[dst].add(1.0)
    inv_deg = (1.0 / jnp.maximum(deg, 1.0)).reshape(n_pad, 1)

    x_f32 = jnp.zeros((n_pad, D), jnp.float32).at[:N, :].set(x)
    x_bf16 = x_f32.astype(jnp.bfloat16)          # aggregation operand (half stream)
    wl_p = jnp.zeros((D, h_pad), jnp.float32).at[:, :H].set(w_l)
    wr_p = jnp.zeros((D, h_pad), jnp.float32).at[:, :H].set(w_r)
    b_p = jnp.zeros((1, h_pad), jnp.float32).at[:, :H].set(b_l.reshape(1, H))

    grid = (n_pad // tile_n, n_pad // tile_k)
    out = pl.pallas_call(
        sage_block_kernel,
        out_shape=jax.ShapeDtypeStruct((n_pad, h_pad), jnp.float32),
        grid_spec=pltpu.PrefetchScalarGridSpec(
            num_scalar_prefetch=0,
            grid=grid,
            in_specs=[
                pl.BlockSpec((tile_n, tile_k), lambda i, k: (i, k)),  # A (int8 0/1)
                pl.BlockSpec((tile_k, D), lambda i, k: (k, 0)),       # x K-tile (bf16)
                pl.BlockSpec((tile_n, D), lambda i, k: (i, 0)),       # x row tile (f32)
                pl.BlockSpec((tile_n, 1), lambda i, k: (i, 0)),       # 1/deg
                pl.BlockSpec((D, h_pad), lambda i, k: (0, 0)),        # W_l
                pl.BlockSpec((D, h_pad), lambda i, k: (0, 0)),        # W_r
                pl.BlockSpec((1, h_pad), lambda i, k: (0, 0)),        # bias
            ],
            out_specs=pl.BlockSpec((tile_n, h_pad), lambda i, k: (i, 0)),
            scratch_shapes=[pltpu.VMEM((tile_n, D), jnp.float32)],
        ),
        compiler_params=pltpu.CompilerParams(
            dimension_semantics=("parallel", "arbitrary"),
            vmem_limit_bytes=32 * 1024 * 1024,
        ),
    )(a_p, x_bf16, x_f32, inv_deg, wl_p, wr_p, b_p)
    # Padded rows [N, n_pad) contain ReLU(bias); slice them off here.
    return out[:N, :H]


def reference(x, edge_index, w_l, w_r, b_l):
    """Module semantics in f32; the only kernel-matching concession is that x
    is rounded to bf16 for the aggregation matmul (MXU input precision).
    The 0/1 adjacency and the per-row 1/deg scale are exact."""
    N = x.shape[0]
    src, dst = edge_index[0], edge_index[1]
    a = jnp.zeros((N, N), jnp.float32).at[dst, src].add(1.0)
    deg = jnp.maximum(a.sum(axis=1, keepdims=True), 1.0)
    x_agg = x.astype(jnp.bfloat16).astype(jnp.float32)
    agg = (a @ x_agg) / deg
    h = agg @ w_l + b_l[None, :] + x @ w_r
    return jnp.maximum(h, 0.0)


if __name__ == "__main__":
    key = jax.random.PRNGKey(0)
    N, input_dim, hidden_dim = 200, 16, 32

    k_x, k_wl, k_wr, k_b = jax.random.split(key, 4)
    x = jax.random.normal(k_x, (N, input_dim), dtype=jnp.float32)

    # Deterministic parameter init (uniform, scaled by 1/sqrt(fan_in)); shapes
    # match SAGEConv(input_dim, hidden_dim): lin_l (with bias) and lin_r,
    # stored transposed as (in_dim, out_dim).
    scale = 1.0 / jnp.sqrt(jnp.float32(input_dim))
    w_l = jax.random.uniform(k_wl, (input_dim, hidden_dim), jnp.float32, -scale, scale)
    w_r = jax.random.uniform(k_wr, (input_dim, hidden_dim), jnp.float32, -scale, scale)
    b_l = jax.random.uniform(k_b, (hidden_dim,), jnp.float32, -scale, scale)

    # Deterministic small graph: ring edges j -> (j+1)%N and j -> (j+3)%N.
    src = jnp.concatenate([jnp.arange(N), jnp.arange(N)]).astype(jnp.int32)
    dst = jnp.concatenate([(jnp.arange(N) + 1) % N, (jnp.arange(N) + 3) % N]).astype(jnp.int32)
    edge_index = jnp.stack([src, dst], axis=0)

    out = graph_sage_block(x, edge_index, w_l, w_r, b_l)
    out = jax.block_until_ready(out)

    ref = reference(x, edge_index, w_l, w_r, b_l)
    assert out.shape == (N, hidden_dim)
    assert jnp.allclose(out, ref, atol=1e-4, rtol=1e-4), "mismatch vs reference"
    print("KERNEL_OK")
</pallas_src>

<mosaic_0001>
module attributes {stable_mosaic.version = 11 : i64} {
  func.func @sage_block_kernel(%arg0: i32, %arg1: i32, %arg2: memref<256x512xi8, #tpu.memory_space<vmem>>, %arg3: memref<512x16xbf16, #tpu.memory_space<vmem>>, %arg4: memref<256x16xf32, #tpu.memory_space<vmem>>, %arg5: memref<256x1xf32, #tpu.memory_space<vmem>>, %arg6: memref<16x128xf32, #tpu.memory_space<vmem>>, %arg7: memref<16x128xf32, #tpu.memory_space<vmem>>, %arg8: memref<1x128xf32, #tpu.memory_space<vmem>>, %arg9: memref<256x128xf32, #tpu.memory_space<vmem>>, %arg10: memref<256x16xf32, #tpu.memory_space<vmem>>) attributes {dimension_semantics = [#tpu.dimension_semantics<parallel>, #tpu.dimension_semantics<arbitrary>], iteration_bounds = array<i64: 2, 1>, scalar_prefetch = 0 : i64, scratch_operands = 1 : i64, tpu.core_type = #tpu.core_type<tc>, window_params = [{transform_indices = @transform_0, window_bounds = array<i64: 256, 512>}, {transform_indices = @transform_1, window_bounds = array<i64: 512, 16>}, {transform_indices = @transform_2, window_bounds = array<i64: 256, 16>}, {transform_indices = @transform_3, window_bounds = array<i64: 256, 1>}, {pipeline_mode = #tpu.pipeline_mode<synchronous>, transform_indices = @transform_4, window_bounds = array<i64: 16, 128>}, {pipeline_mode = #tpu.pipeline_mode<synchronous>, transform_indices = @transform_5, window_bounds = array<i64: 16, 128>}, {pipeline_mode = #tpu.pipeline_mode<synchronous>, transform_indices = @transform_6, window_bounds = array<i64: 1, 128>}, {transform_indices = @transform_7, window_bounds = array<i64: 256, 128>}]} {
    %c0_i32 = arith.constant 0 : i32
    %0 = arith.cmpi eq, %arg1, %c0_i32 : i32
    %1 = arith.extui %0 : i1 to i32
    %c0_i32_0 = arith.constant 0 : i32
    %2 = arith.cmpi ne, %1, %c0_i32_0 : i32
    scf.if %2 {
      %cst_10 = arith.constant 0.000000e+00 : f32
      %13 = vector.broadcast %cst_10 : f32 to vector<256x16xf32>
      %c0_11 = arith.constant 0 : index
      %c0_12 = arith.constant 0 : index
      %14 = vector.load %arg10[%c0_11, %c0_12] : memref<256x16xf32, #tpu.memory_space<vmem>>, vector<256x16xf32>
      tpu.vector_store %arg10[%c0_11, %c0_12], %13 {strides = array<i32>} : memref<256x16xf32, #tpu.memory_space<vmem>>, vector<256x16xf32>,
    } else {
    }
    %c0 = arith.constant 0 : index
    %c0_1 = arith.constant 0 : index
    %3 = vector.load %arg10[%c0, %c0_1] : memref<256x16xf32, #tpu.memory_space<vmem>>, vector<256x16xf32>
    %c0_2 = arith.constant 0 : index
    %c0_3 = arith.constant 0 : index
    %4 = vector.load %arg2[%c0_2, %c0_3] : memref<256x512xi8, #tpu.memory_space<vmem>>, vector<256x512xi8>
    %5 = arith.sitofp %4 : vector<256x512xi8> to vector<256x512xbf16>
    %c0_4 = arith.constant 0 : index
    %c0_5 = arith.constant 0 : index
    %6 = vector.load %arg3[%c0_4, %c0_5] : memref<512x16xbf16, #tpu.memory_space<vmem>>, vector<512x16xbf16>
    %cst = arith.constant dense<0.000000e+00> : vector<256x16xf32>
    %7 = tpu.matmul %5, %6, %cst {dimension_numbers = #tpu.dot_dimension_numbers<[1], [0], [0], [1], [0, 0, 1, 1], [], []>} : vector<256x512xbf16>, vector<512x16xbf16>, vector<256x16xf32> -> vector<256x16xf32>
    %8 = arith.addf %3, %7 : vector<256x16xf32>
    %c0_6 = arith.constant 0 : index
    %c0_7 = arith.constant 0 : index
    %9 = vector.load %arg10[%c0_6, %c0_7] : memref<256x16xf32, #tpu.memory_space<vmem>>, vector<256x16xf32>
    tpu.vector_store %arg10[%c0_6, %c0_7], %8 {strides = array<i32>} : memref<256x16xf32, #tpu.memory_space<vmem>>, vector<256x16xf32>,
    %c0_i32_8 = arith.constant 0 : i32
    %10 = arith.cmpi eq, %arg1, %c0_i32_8 : i32
    %11 = arith.extui %10 : i1 to i32
    %c0_i32_9 = arith.constant 0 : i32
    %12 = arith.cmpi ne, %11, %c0_i32_9 : i32
    scf.if %12 {
      %c0_10 = arith.constant 0 : index
      %c0_11 = arith.constant 0 : index
      %13 = vector.load %arg10[%c0_10, %c0_11] : memref<256x16xf32, #tpu.memory_space<vmem>>, vector<256x16xf32>
      %c0_12 = arith.constant 0 : index
      %c0_13 = arith.constant 0 : index
      %14 = vector.load %arg5[%c0_12, %c0_13] : memref<256x1xf32, #tpu.memory_space<vmem>>, vector<256x1xf32>
      %15 = vector.broadcast %14 : vector<256x1xf32> to vector<256x16xf32>
      %16 = arith.mulf %13, %15 : vector<256x16xf32>
      %c0_14 = arith.constant 0 : index
      %c0_15 = arith.constant 0 : index
      %17 = vector.load %arg6[%c0_14, %c0_15] : memref<16x128xf32, #tpu.memory_space<vmem>>, vector<16x128xf32>
      %cst_16 = arith.constant dense<0.000000e+00> : vector<256x128xf32>
      %18 = tpu.matmul %16, %17, %cst_16 {dimension_numbers = #tpu.dot_dimension_numbers<[1], [0], [0], [1], [0, 0, 1, 1], [], []>} : vector<256x16xf32>, vector<16x128xf32>, vector<256x128xf32> -> vector<256x128xf32>
      %c0_17 = arith.constant 0 : index
      %c0_18 = arith.constant 0 : index
      %19 = vector.load %arg4[%c0_17, %c0_18] : memref<256x16xf32, #tpu.memory_space<vmem>>, vector<256x16xf32>
      %c0_19 = arith.constant 0 : index
      %c0_20 = arith.constant 0 : index
      %20 = vector.load %arg7[%c0_19, %c0_20] : memref<16x128xf32, #tpu.memory_space<vmem>>, vector<16x128xf32>
      %cst_21 = arith.constant dense<0.000000e+00> : vector<256x128xf32>
      %21 = tpu.matmul %19, %20, %cst_21 {dimension_numbers = #tpu.dot_dimension_numbers<[1], [0], [0], [1], [0, 0, 1, 1], [], []>} : vector<256x16xf32>, vector<16x128xf32>, vector<256x128xf32> -> vector<256x128xf32>
      %22 = arith.addf %18, %21 : vector<256x128xf32>
      %c0_22 = arith.constant 0 : index
      %c0_23 = arith.constant 0 : index
      %23 = vector.load %arg8[%c0_22, %c0_23] : memref<1x128xf32, #tpu.memory_space<vmem>>, vector<1x128xf32>
      %24 = vector.broadcast %23 : vector<1x128xf32> to vector<256x128xf32>
      %25 = arith.addf %22, %24 : vector<256x128xf32>
      %cst_24 = arith.constant 0.000000e+00 : f32
      %26 = vector.broadcast %cst_24 : f32 to vector<256x128xf32>
      %27 = arith.maximumf %25, %26 : vector<256x128xf32>
      %c0_25 = arith.constant 0 : index
      %c0_26 = arith.constant 0 : index
      %28 = vector.load %arg9[%c0_25, %c0_26] : memref<256x128xf32, #tpu.memory_space<vmem>>, vector<256x128xf32>
      tpu.vector_store %arg9[%c0_25, %c0_26], %27 {strides = array<i32>} : memref<256x128xf32, #tpu.memory_space<vmem>>, vector<256x128xf32>,
    } else {
    }
    return
  }
  func.func @transform_0(%arg0: i32, %arg1: i32) -> (i32, i32) {
    %c0_i32 = arith.constant 0 : i32
    return %arg0, %arg1 : i32, i32
  }
  func.func @transform_1(%arg0: i32, %arg1: i32) -> (i32, i32) {
    %c0_i32 = arith.constant 0 : i32
    %c0_i32_0 = arith.constant 0 : i32
    return %arg1, %c0_i32 : i32, i32
  }
  func.func @transform_2(%arg0: i32, %arg1: i32) -> (i32, i32) {
    %c0_i32 = arith.constant 0 : i32
    %c0_i32_0 = arith.constant 0 : i32
    return %arg0, %c0_i32 : i32, i32
  }
  func.func @transform_3(%arg0: i32, %arg1: i32) -> (i32, i32) {
    %c0_i32 = arith.constant 0 : i32
    %c0_i32_0 = arith.constant 0 : i32
    return %arg0, %c0_i32 : i32, i32
  }
  func.func @transform_4(%arg0: i32, %arg1: i32) -> (i32, i32) {
    %c0_i32 = arith.constant 0 : i32
    %c0_i32_0 = arith.constant 0 : i32
    %c0_i32_1 = arith.constant 0 : i32
    return %c0_i32, %c0_i32_0 : i32, i32
  }
  func.func @transform_5(%arg0: i32, %arg1: i32) -> (i32, i32) {
    %c0_i32 = arith.constant 0 : i32
    %c0_i32_0 = arith.constant 0 : i32
    %c0_i32_1 = arith.constant 0 : i32
    return %c0_i32, %c0_i32_0 : i32, i32
  }
  func.func @transform_6(%arg0: i32, %arg1: i32) -> (i32, i32) {
    %c0_i32 = arith.constant 0 : i32
    %c0_i32_0 = arith.constant 0 : i32
    %c0_i32_1 = arith.constant 0 : i32
    return %c0_i32, %c0_i32_0 : i32, i32
  }
  func.func @transform_7(%arg0: i32, %arg1: i32) -> (i32, i32) {
    %c0_i32 = arith.constant 0 : i32
    %c0_i32_0 = arith.constant 0 : i32
    return %arg0, %c0_i32 : i32, i32
  }
}

</mosaic_0001>

<llo_original>
// kernel: tpu_custom_call.1
$region0: #{tpu_custom_call.1}
  #allocation0 [shape = 'u32[]', space=smem, size = 0x4, offset = 0x4, fixed_abs, tag = 'smem constant byte address 0x4 - core index']
  #allocation1 [shape = 'u32[144,128]{1,0:T(1,128)}', space=vmem, size = 0x12000, scoped, tag = 'internal scratch']
  #allocation2 [shape = 'f32[256,16]{1,0:T(8,128)}', space=vmem, size = 0x20000, scoped, tag = 'scratch operand']
  %s0 = inlined_call_operand.vmem [shape: s8[512,512], index: 0, kind: input, shape index: {}]
  %s1 = inlined_call_operand.vmem [shape: bf16[512,16], index: 1, kind: input, shape index: {}]
  %s2 = inlined_call_operand.vmem [shape: f32[512,16], index: 2, kind: input, shape index: {}]
  %s3 = inlined_call_operand.vmem [shape: f32[512,1], index: 3, kind: input, shape index: {}]
  %s4 = inlined_call_operand.vmem [shape: f32[16,128], index: 4, kind: input, shape index: {}]
  %s5 = inlined_call_operand.vmem [shape: f32[16,128], index: 5, kind: input, shape index: {}]
  %s6 = inlined_call_operand.vmem [shape: f32[1,128], index: 6, kind: input, shape index: {}]
  %s7 = inlined_call_operand.hbm [shape: f32[512,128], index: 7, kind: output, shape index: {}]
  %s8 = sld [smem:[#allocation0]]
  $region69: #{tpu_custom_call.1} parent=0
    _
  %s10 = ssub.s32 1, %s8
  %s11 = scalar_select 0, %s10, %s8
  $region1: #{tpu_custom_call.1} parent=0
    #allocation3 [shape = 'u8[262144]{0}', space=vmem, size = 0x40000, scoped, tag = 'output window, operand 0']
    #allocation4 [shape = 's32[2]{0}', space=sflag, size = 0x8, scoped, tag = 'scoped memory for tpu_custom_call.1']
    %12 = vsyncpa [#allocation4], 0
    %s13 = scalar_lea.sflag [#allocation4], 1
    %14 = vsyncpa %s13, 0
    loop: start=0, step=1, limit=4
    $region2: #{tpu_custom_call.1} parent=1 // loop_pre_header
      _
    $region3: #{tpu_custom_call.1} parent=1 // loop_header
      %s16 = sphi 0, %s20
      %p17 = scmp.ge.s32.totalorder %s16, 4
      %s23 = sphi 0, %s35
      %s24 = sphi 0, %s31
      %s25 = sphi 0, %s23
      %s26 = sphi 0, %s24
      %s27 = sphi 0, %s25
      %s28 = sphi 0, %s26
      %s40 = sphi 0, %s42
      %s43 = sphi 0, %s40
      %s44 = sphi 0, %s43
      %s60 = sphi 0, %s44
      %s66 = sphi 0, %s68
      %s69 = sphi 0, %s66
      %s70 = sphi 0, %s69
      %s86 = sphi 0, %s70
      %s92 = sphi 0, %s94
      %s95 = sphi 0, %s92
      %s96 = sphi 0, %s95
      %s112 = sphi 0, %s96
      %s118 = sphi 0, %s120
      %s121 = sphi 0, %s118
      %s122 = sphi 0, %s121
      %s138 = sphi 0, %s122
      %s142 = sphi 0, %s142
      %s144 = sphi 0, %s142
      %s145 = sphi 0, %s144
      %s159 = sphi 0, %s145
      %s163 = sphi 0, %s163
      %s165 = sphi 0, %s163
      %s166 = sphi 0, %s165
      %s180 = sphi 0, %s166
      %s184 = sphi 0, %s184
      %s186 = sphi 0, %s184
      %s187 = sphi 0, %s186
      %s201 = sphi 0, %s187
      %s207 = sphi 0, %s209
      %s210 = sphi 0, %s207
      %s211 = sphi 0, %s210
      %s227 = sphi 0, %s211
    $region4: #{tpu_custom_call.1} parent=1 // loop_header_branch
      %19 = sbr.rel (%p17) target = $region8
    $region5: #{tpu_custom_call.1} parent=1 // loop_body
      %s21 = ssub.s32 %s16, 1
      %s22 = ssub.s32 %s16, 2
      %s29 = sadd.s32 1, %s24
      %p30 = scmp.ge.s32.totalorder %s29, 1
      %s31 = scalar_select %p30, 0, %s29
      %s32 = sadd.s32 1, %s23
      %s33 = scalar_select %p30, %s32, %s23
      %p34 = scmp.ge.s32.totalorder %s33, 2
      %s35 = scalar_select %p34, 0, %s33
      %s36 = ssub.s32 %s23, %s35
      %s37 = ssub.s32 %s24, %s31
      %s38 = sor.u32 %s36, %s37
      %p39 = scmp.eq.s32.totalorder %s38, 0
      %s41 = sadd.s32 %s40, 1
      %s42 = scalar_select %p39, %s40, %s41
      %p45 = pneg %p39
      %p46 = scmp.eq.s32.totalorder %s16, 1
      %p47 = por %p45, %p46
      %p48 = scmp.ne.s32.totalorder %s40, %s43
      %p49 = scmp.eq.s32.totalorder %s16, 0
      %p50 = por %p48, %p49
      %p51 = scmp.ne.s32.totalorder %s40, %s43
      %p52 = scmp.eq.s32.totalorder %s21, 1
      %p53 = por %p51, %p52
      %p54 = scmp.ne.s32.totalorder %s43, %s44
      %p55 = scmp.eq.s32.totalorder %s21, 0
      %p56 = por %p54, %p55
      %p57 = scmp.ne.s32.totalorder %s43, %s44
      %p58 = scmp.eq.s32.totalorder %s22, 1
      %p59 = por %p57, %p58
      %p61 = scmp.ne.s32.totalorder %s44, %s60
      %p62 = scmp.eq.s32.totalorder %s22, 0
      %p63 = por %p61, %p62
      %s64 = ssub.s32 %s24, %s31
      %p65 = scmp.eq.s32.totalorder %s64, 0
      %s67 = sadd.s32 %s66, 1
      %s68 = scalar_select %p65, %s66, %s67
      %p71 = pneg %p65
      %p72 = scmp.eq.s32.totalorder %s16, 1
      %p73 = por %p71, %p72
      %p74 = scmp.ne.s32.totalorder %s66, %s69
      %p75 = scmp.eq.s32.totalorder %s16, 0
      %p76 = por %p74, %p75
      %p77 = scmp.ne.s32.totalorder %s66, %s69
      %p78 = scmp.eq.s32.totalorder %s21, 1
      %p79 = por %p77, %p78
      %p80 = scmp.ne.s32.totalorder %s69, %s70
      %p81 = scmp.eq.s32.totalorder %s21, 0
      %p82 = por %p80, %p81
      %p83 = scmp.ne.s32.totalorder %s69, %s70
      %p84 = scmp.eq.s32.totalorder %s22, 1
      %p85 = por %p83, %p84
      %p87 = scmp.ne.s32.totalorder %s70, %s86
      %p88 = scmp.eq.s32.totalorder %s22, 0
      %p89 = por %p87, %p88
      %s90 = ssub.s32 %s23, %s35
      %p91 = scmp.eq.s32.totalorder %s90, 0
      %s93 = sadd.s32 %s92, 1
      %s94 = scalar_select %p91, %s92, %s93
      %p97 = pneg %p91
      %p98 = scmp.eq.s32.totalorder %s16, 1
      %p99 = por %p97, %p98
      %p100 = scmp.ne.s32.totalorder %s92, %s95
      %p101 = scmp.eq.s32.totalorder %s16, 0
      %p102 = por %p100, %p101
      %p103 = scmp.ne.s32.totalorder %s92, %s95
      %p104 = scmp.eq.s32.totalorder %s21, 1
      %p105 = por %p103, %p104
      %p106 = scmp.ne.s32.totalorder %s95, %s96
      %p107 = scmp.eq.s32.totalorder %s21, 0
      %p108 = por %p106, %p107
      %p109 = scmp.ne.s32.totalorder %s95, %s96
      %p110 = scmp.eq.s32.totalorder %s22, 1
      %p111 = por %p109, %p110
      %p113 = scmp.ne.s32.totalorder %s96, %s112
      %p114 = scmp.eq.s32.totalorder %s22, 0
      %p115 = por %p113, %p114
      %s116 = ssub.s32 %s23, %s35
      %p117 = scmp.eq.s32.totalorder %s116, 0
      %s119 = sadd.s32 %s118, 1
      %s120 = scalar_select %p117, %s118, %s119
      %p123 = pneg %p117
      %p124 = scmp.eq.s32.totalorder %s16, 1
      %p125 = por %p123, %p124
      %p126 = scmp.ne.s32.totalorder %s118, %s121
      %p127 = scmp.eq.s32.totalorder %s16, 0
      %p128 = por %p126, %p127
      %p129 = scmp.ne.s32.totalorder %s118, %s121
      %p130 = scmp.eq.s32.totalorder %s21, 1
      %p131 = por %p129, %p130
      %p132 = scmp.ne.s32.totalorder %s121, %s122
      %p133 = scmp.eq.s32.totalorder %s21, 0
      %p134 = por %p132, %p133
      %p135 = scmp.ne.s32.totalorder %s121, %s122
      %p136 = scmp.eq.s32.totalorder %s22, 1
      %p137 = por %p135, %p136
      %p139 = scmp.ne.s32.totalorder %s122, %s138
      %p140 = scmp.eq.s32.totalorder %s22, 0
      %p141 = por %p139, %p140
      %s143 = sadd.s32 %s142, 1
      %p146 = scmp.eq.s32.totalorder %s16, 1
      %p147 = scmp.ne.s32.totalorder %s142, %s144
      %p148 = scmp.eq.s32.totalorder %s16, 0
      %p149 = por %p147, %p148
      %p150 = scmp.ne.s32.totalorder %s142, %s144
      %p151 = scmp.eq.s32.totalorder %s21, 1
      %p152 = por %p150, %p151
      %p153 = scmp.ne.s32.totalorder %s144, %s145
      %p154 = scmp.eq.s32.totalorder %s21, 0
      %p155 = por %p153, %p154
      %p156 = scmp.ne.s32.totalorder %s144, %s145
      %p157 = scmp.eq.s32.totalorder %s22, 1
      %p158 = por %p156, %p157
      %p160 = scmp.ne.s32.totalorder %s145, %s159
      %p161 = scmp.eq.s32.totalorder %s22, 0
      %p162 = por %p160, %p161
      %s164 = sadd.s32 %s163, 1
      %p167 = scmp.eq.s32.totalorder %s16, 1
      %p168 = scmp.ne.s32.totalorder %s163, %s165
      %p169 = scmp.eq.s32.totalorder %s16, 0
      %p170 = por %p168, %p169
      %p171 = scmp.ne.s32.totalorder %s163, %s165
      %p172 = scmp.eq.s32.totalorder %s21, 1
      %p173 = por %p171, %p172
      %p174 = scmp.ne.s32.totalorder %s165, %s166
      %p175 = scmp.eq.s32.totalorder %s21, 0
      %p176 = por %p174, %p175
      %p177 = scmp.ne.s32.totalorder %s165, %s166
      %p178 = scmp.eq.s32.totalorder %s22, 1
      %p179 = por %p177, %p178
      %p181 = scmp.ne.s32.totalorder %s166, %s180
      %p182 = scmp.eq.s32.totalorder %s22, 0
      %p183 = por %p181, %p182
      %s185 = sadd.s32 %s184, 1
      %p188 = scmp.eq.s32.totalorder %s16, 1
      %p189 = scmp.ne.s32.totalorder %s184, %s186
      %p190 = scmp.eq.s32.totalorder %s16, 0
      %p191 = por %p189, %p190
      %p192 = scmp.ne.s32.totalorder %s184, %s186
      %p193 = scmp.eq.s32.totalorder %s21, 1
      %p194 = por %p192, %p193
      %p195 = scmp.ne.s32.totalorder %s186, %s187
      %p196 = scmp.eq.s32.totalorder %s21, 0
      %p197 = por %p195, %p196
      %p198 = scmp.ne.s32.totalorder %s186, %s187
      %p199 = scmp.eq.s32.totalorder %s22, 1
      %p200 = por %p198, %p199
      %p202 = scmp.ne.s32.totalorder %s187, %s201
      %p203 = scmp.eq.s32.totalorder %s22, 0
      %p204 = por %p202, %p203
      %s205 = ssub.s32 %s23, %s35
      %p206 = scmp.eq.s32.totalorder %s205, 0
      %s208 = sadd.s32 %s207, 1
      %s209 = scalar_select %p206, %s207, %s208
      %p212 = pneg %p206
      %p213 = scmp.eq.s32.totalorder %s16, 1
      %p214 = por %p212, %p213
      %p215 = scmp.ne.s32.totalorder %s207, %s210
      %p216 = scmp.eq.s32.totalorder %s16, 0
      %p217 = por %p215, %p216
      %p218 = scmp.ne.s32.totalorder %s207, %s210
      %p219 = scmp.eq.s32.totalorder %s21, 1
      %p220 = por %p218, %p219
      %p221 = scmp.ne.s32.totalorder %s210, %s211
      %p222 = scmp.eq.s32.totalorder %s21, 0
      %p223 = por %p221, %p222
      %p224 = scmp.ne.s32.totalorder %s210, %s211
      %p225 = scmp.eq.s32.totalorder %s22, 1
      %p226 = por %p224, %p225
      %p228 = scmp.ne.s32.totalorder %s211, %s227
      %p229 = scmp.eq.s32.totalorder %s22, 0
      %p230 = por %p228, %p229
      %p231 = scmp.le.s32.totalorder 1, %s16
      %p232 = scmp.lt.s32.totalorder %s16, 3
      %p233 = pnand %p231, %p232
      %p234 = pneg %p233
      // Predicated region
      $region9: #{tpu_custom_call.1} parent=5 // pred_check
        _
      $region10: #{tpu_custom_call.1} parent=5 // pred_check_branch
        %236 = sbr.rel (%p233) target = $region12
      $region11: #{tpu_custom_call.1} parent=5 // pred_region
        %s237 = ssub.s32 %s16, 1
        // Predicated region
        $region13: #{tpu_custom_call.1} parent=11 // pred_check
          %p238 = pneg %p82
        $region14: #{tpu_custom_call.1} parent=11 // pred_check_branch
          %240 = sbr.rel (%p238) target = $region16
        $region15: #{tpu_custom_call.1} parent=11 // pred_region
          %s241 = smul.u32 64, %s26
          %p242 = scmp.lt.s32.totalorder %s241, 63
          %s243 = scalar_select %p242, %s241, 63
          %s244 = smul.addr %s243, 4
          %s245 = scalar_lea.vmem %s1, %s244
          %s246 = smul.u32 64, %s26
        $region16: #{tpu_custom_call.1} parent=11 // pred_fallthru
          _
        // Predicated region
        $region17: #{tpu_custom_call.1} parent=11 // pred_check
          %p247 = pneg %p155
        $region18: #{tpu_custom_call.1} parent=11 // pred_check_branch
          %249 = sbr.rel (%p247) target = $region20
        $region19: #{tpu_custom_call.1} parent=11 // pred_region
          _
        $region20: #{tpu_custom_call.1} parent=11 // pred_fallthru
          _
        // Predicated region
        $region21: #{tpu_custom_call.1} parent=11 // pred_check
          %p250 = pneg %p176
        $region22: #{tpu_custom_call.1} parent=11 // pred_check_branch
          %252 = sbr.rel (%p250) target = $region24
        $region23: #{tpu_custom_call.1} parent=11 // pred_region
          _
        $region24: #{tpu_custom_call.1} parent=11 // pred_fallthru
          _
        // Predicated region
        $region25: #{tpu_custom_call.1} parent=11 // pred_check
          %p253 = pneg %p197
        $region26: #{tpu_custom_call.1} parent=11 // pred_check_branch
          %255 = sbr.rel (%p253) target = $region28
        $region27: #{tpu_custom_call.1} parent=11 // pred_region
          _
        $region28: #{tpu_custom_call.1} parent=11 // pred_fallthru
          _
      $region12: #{tpu_custom_call.1} parent=5 // pred_fallthru
        _
      %p256 = scmp.lt.s32.totalorder %s16, 2
      // Predicated region
      $region29: #{tpu_custom_call.1} parent=5 // pred_check
        %p257 = pneg %p256
      $region30: #{tpu_custom_call.1} parent=5 // pred_check_branch
        %259 = sbr.rel (%p257) target = $region32
      $region31: #{tpu_custom_call.1} parent=5 // pred_region
        // Predicated region
        $region33: #{tpu_custom_call.1} parent=31 // pred_check
          %p260 = pneg %p50
        $region34: #{tpu_custom_call.1} parent=31 // pred_check_branch
          %262 = sbr.rel (%p260) target = $region36
        $region35: #{tpu_custom_call.1} parent=31 // pred_region
          %s263 = smul.u32 8, %s23
          %s264 = smul.u32 4, %s24
          %p265 = scmp.lt.s32.totalorder %s263, 15
          %s266 = scalar_select %p265, %s263, 15
          %p267 = scmp.lt.s32.totalorder %s264, 3
          %s268 = scalar_select %p267, %s264, 3
          %s269 = smul.addr %s266, 4
          %s270 = sadd.s32 %s268, %s269
          %s271 = smul.addr %s270, 8
          %s272 = scalar_lea.vmem %s0, %s271
          %s273 = smul.u32 8, %s23
          %s274 = smul.u32 4, %s24
        $region36: #{tpu_custom_call.1} parent=31 // pred_fallthru
          _
        // Predicated region
        $region37: #{tpu_custom_call.1} parent=31 // pred_check
          %p275 = pneg %p102
        $region38: #{tpu_custom_call.1} parent=31 // pred_check_branch
          %277 = sbr.rel (%p275) target = $region40
        $region39: #{tpu_custom_call.1} parent=31 // pred_region
          %s278 = smul.u32 32, %s23
          %p279 = scmp.lt.s32.totalorder %s278, 63
          %s280 = scalar_select %p279, %s278, 63
          %s281 = smul.addr %s280, 8
          %s282 = scalar_lea.vmem %s2, %s281
          %s283 = smul.u32 32, %s23
        $region40: #{tpu_custom_call.1} parent=31 // pred_fallthru
          _
        // Predicated region
        $region41: #{tpu_custom_call.1} parent=31 // pred_check
          %p284 = pneg %p128
        $region42: #{tpu_custom_call.1} parent=31 // pred_check_branch
          %286 = sbr.rel (%p284) target = $region44
        $region43: #{tpu_custom_call.1} parent=31 // pred_region
          %s287 = smul.u32 32, %s23
          %p288 = scmp.lt.s32.totalorder %s287, 63
          %s289 = scalar_select %p288, %s287, 63
          %s290 = smul.addr %s289, 8
          %s291 = scalar_lea.vmem %s3, %s290
          %s292 = smul.u32 32, %s23
        $region44: #{tpu_custom_call.1} parent=31 // pred_fallthru
          _
      $region32: #{tpu_custom_call.1} parent=5 // pred_fallthru
        _
      %p293 = scmp.le.s32.totalorder 1, %s16
      %p294 = scmp.lt.s32.totalorder %s16, 3
      %p295 = pnand %p293, %p294
      %p296 = pneg %p295
      // Predicated region
      $region45: #{tpu_custom_call.1} parent=5 // pred_check
        _
      $region46: #{tpu_custom_call.1} parent=5 // pred_check_branch
        %298 = sbr.rel (%p295) target = $region48
      $region47: #{tpu_custom_call.1} parent=5 // pred_region
        %s299 = ssub.s32 %s16, 1
        %s300 = smul.u32 8, %s25
        %s301 = smul.u32 4, %s26
        %p302 = scmp.lt.s32.totalorder %s300, 15
        %s303 = scalar_select %p302, %s300, 15
        %p304 = scmp.lt.s32.totalorder %s301, 3
        %s305 = scalar_select %p304, %s301, 3
        %s306 = smul.addr %s303, 4
        %s307 = sadd.s32 %s305, %s306
        %s308 = smul.addr %s307, 8
        %s309 = scalar_lea.vmem %s0, %s308
        %p310 = pneg %p56
        %p311 = pneg %p53
        %s312 = smul.u32 64, %s26
        %p313 = scmp.lt.s32.totalorder %s312, 63
        %s314 = scalar_select %p313, %s312, 63
        %s315 = smul.addr %s314, 4
        %s316 = scalar_lea.vmem %s1, %s315
        %p317 = pneg %p82
        %p318 = pneg %p79
        %s319 = smul.u32 32, %s25
        %p320 = scmp.lt.s32.totalorder %s319, 63
        %s321 = scalar_select %p320, %s319, 63
        %s322 = smul.addr %s321, 8
        %s323 = scalar_lea.vmem %s2, %s322
        %p324 = pneg %p108
        %p325 = pneg %p105
        %s326 = smul.u32 32, %s25
        %p327 = scmp.lt.s32.totalorder %s326, 63
        %s328 = scalar_select %p327, %s326, 63
        %s329 = smul.addr %s328, 8
        %s330 = scalar_lea.vmem %s3, %s329
        %p331 = pneg %p134
        %p332 = pneg %p131
        %p333 = pneg %p155
        %p334 = pneg %p152
        %p335 = pneg %p176
        %p336 = pneg %p173
        %p337 = pneg %p197
        %p338 = pneg %p194
        %p339 = pneg %p223
        %p340 = pneg %p220
        %s341 = sand.u32 %s210, 1
        %s342 = scalar_lea.sflag [#allocation4], %s341
        %s343 = sand.u32 %s210, 1
        %s344 = smul.addr %s343, 256
        %s345 = scalar_lea.vmem [#allocation3], %s344
        %s346 = smul.u32 8, %s25
        %s347 = smul.u32 4, %s26
        %p348 = scmp.lt.s32.totalorder %s346, 15
        %s349 = scalar_select %p348, %s346, 15
        %p350 = scmp.lt.s32.totalorder %s347, 3
        %s351 = scalar_select %p350, %s347, 3
        %s352 = smul.addr %s349, 4
        %s353 = sadd.s32 %s351, %s352
        %s354 = smul.addr %s353, 8
        %s355 = scalar_lea.vmem %s0, %s354
        %s356 = smul.u32 8, %s25
        %s357 = smul.u32 4, %s26
        %s358 = smul.u32 64, %s26
        %p359 = scmp.lt.s32.totalorder %s358, 63
        %s360 = scalar_select %p359, %s358, 63
        %s361 = smul.addr %s360, 4
        %s362 = scalar_lea.vmem %s1, %s361
        %s363 = smul.u32 64, %s26
        %s364 = smul.u32 32, %s25
        %p365 = scmp.lt.s32.totalorder %s364, 63
        %s366 = scalar_select %p365, %s364, 63
        %s367 = smul.addr %s366, 8
        %s368 = scalar_lea.vmem %s2, %s367
        %s369 = smul.u32 32, %s25
        %s370 = smul.u32 32, %s25
        %p371 = scmp.lt.s32.totalorder %s370, 63
        %s372 = scalar_select %p371, %s370, 63
        %s373 = smul.addr %s372, 8
        %s374 = scalar_lea.vmem %s3, %s373
        %s375 = smul.u32 32, %s25
        %s376 = smul.u32 32, %s25
        %p378 = scmp.eq.s32.totalorder %s26, 0
        // Predicated region
        $region49: #{tpu_custom_call.1} parent=47 // pred_check
          %p379 = pneg %p378
        $region50: #{tpu_custom_call.1} parent=47 // pred_check_branch
          %381 = sbr.rel (%p379) target = $region52
        $region51: #{tpu_custom_call.1} parent=47 // pred_region
          %vm382 = vcmask 130048
          %383 = vst.msk [vmem:[#allocation2] sm:$0xff] %vm382, 0.0
          %384 = vst.msk [vmem:[#allocation2 + $0x8] sm:$0xff] %vm382, 0.0
          %385 = vst.msk [vmem:[#allocation2 + $0x10] sm:$0xff] %vm382, 0.0
          %386 = vst.msk [vmem:[#allocation2 + $0x18] sm:$0xff] %vm382, 0.0
          %387 = vst.msk [vmem:[#allocation2 + $0x20] sm:$0xff] %vm382, 0.0
          %388 = vst.msk [vmem:[#allocation2 + $0x28] sm:$0xff] %vm382, 0.0
          %389 = vst.msk [vmem:[#allocation2 + $0x30] sm:$0xff] %vm382, 0.0
          %390 = vst.msk [vmem:[#allocation2 + $0x38] sm:$0xff] %vm382, 0.0
          %391 = vst.msk [vmem:[#allocation2 + $0x40] sm:$0xff] %vm382, 0.0
          %392 = vst.msk [vmem:[#allocation2 + $0x48] sm:$0xff] %vm382, 0.0
          %393 = vst.msk [vmem:[#allocation2 + $0x50] sm:$0xff] %vm382, 0.0
          %394 = vst.msk [vmem:[#allocation2 + $0x58] sm:$0xff] %vm382, 0.0
          %395 = vst.msk [vmem:[#allocation2 + $0x60] sm:$0xff] %vm382, 0.0
          %396 = vst.msk [vmem:[#allocation2 + $0x68] sm:$0xff] %vm382, 0.0
          %397 = vst.msk [vmem:[#allocation2 + $0x70] sm:$0xff] %vm382, 0.0
          %398 = vst.msk [vmem:[#allocation2 + $0x78] sm:$0xff] %vm382, 0.0
          %399 = vst.msk [vmem:[#allocation2 + $0x80] sm:$0xff] %vm382, 0.0
          %400 = vst.msk [vmem:[#allocation2 + $0x88] sm:$0xff] %vm382, 0.0
          %401 = vst.msk [vmem:[#allocation2 + $0x90] sm:$0xff] %vm382, 0.0
          %402 = vst.msk [vmem:[#allocation2 + $0x98] sm:$0xff] %vm382, 0.0
          %403 = vst.msk [vmem:[#allocation2 + $0xa0] sm:$0xff] %vm382, 0.0
          %404 = vst.msk [vmem:[#allocation2 + $0xa8] sm:$0xff] %vm382, 0.0
          %405 = vst.msk [vmem:[#allocation2 + $0xb0] sm:$0xff] %vm382, 0.0
          %406 = vst.msk [vmem:[#allocation2 + $0xb8] sm:$0xff] %vm382, 0.0
          %407 = vst.msk [vmem:[#allocation2 + $0xc0] sm:$0xff] %vm382, 0.0
          %408 = vst.msk [vmem:[#allocation2 + $0xc8] sm:$0xff] %vm382, 0.0
          %409 = vst.msk [vmem:[#allocation2 + $0xd0] sm:$0xff] %vm382, 0.0
          %410 = vst.msk [vmem:[#allocation2 + $0xd8] sm:$0xff] %vm382, 0.0
          %411 = vst.msk [vmem:[#allocation2 + $0xe0] sm:$0xff] %vm382, 0.0
          %412 = vst.msk [vmem:[#allocation2 + $0xe8] sm:$0xff] %vm382, 0.0
          %413 = vst.msk [vmem:[#allocation2 + $0xf0] sm:$0xff] %vm382, 0.0
          %414 = vst.msk [vmem:[#allocation2 + $0xf8] sm:$0xff] %vm382, 0.0
        $region52: #{tpu_custom_call.1} parent=47 // pred_fallthru
          _
        %v415 = vld [vmem:[#allocation2] sm:$0xff]
        %v416 = vld [vmem:[#allocation2 + $0x8] sm:$0xff]
        %v417 = vld [vmem:[#allocation2 + $0x10] sm:$0xff]
        %v418 = vld [vmem:[#allocation2 + $0x18] sm:$0xff]
        %v419 = vld [vmem:[#allocation2 + $0x20] sm:$0xff]
        %v420 = vld [vmem:[#allocation2 + $0x28] sm:$0xff]
        %v421 = vld [vmem:[#allocation2 + $0x30] sm:$0xff]
        %v422 = vld [vmem:[#allocation2 + $0x38] sm:$0xff]
        %v423 = vld [vmem:[#allocation2 + $0x40] sm:$0xff]
        %v424 = vld [vmem:[#allocation2 + $0x48] sm:$0xff]
        %v425 = vld [vmem:[#allocation2 + $0x50] sm:$0xff]
        %v426 = vld [vmem:[#allocation2 + $0x58] sm:$0xff]
        %v427 = vld [vmem:[#allocation2 + $0x60] sm:$0xff]
        %v428 = vld [vmem:[#allocation2 + $0x68] sm:$0xff]
        %v429 = vld [vmem:[#allocation2 + $0x70] sm:$0xff]
        %v430 = vld [vmem:[#allocation2 + $0x78] sm:$0xff]
        %v431 = vld [vmem:[#allocation2 + $0x80] sm:$0xff]
        %v432 = vld [vmem:[#allocation2 + $0x88] sm:$0xff]
        %v433 = vld [vmem:[#allocation2 + $0x90] sm:$0xff]
        %v434 = vld [vmem:[#allocation2 + $0x98] sm:$0xff]
        %v435 = vld [vmem:[#allocation2 + $0xa0] sm:$0xff]
        %v436 = vld [vmem:[#allocation2 + $0xa8] sm:$0xff]
        %v437 = vld [vmem:[#allocation2 + $0xb0] sm:$0xff]
        %v438 = vld [vmem:[#allocation2 + $0xb8] sm:$0xff]
        %v439 = vld [vmem:[#allocation2 + $0xc0] sm:$0xff]
        %v440 = vld [vmem:[#allocation2 + $0xc8] sm:$0xff]
        %v441 = vld [vmem:[#allocation2 + $0xd0] sm:$0xff]
        %v442 = vld [vmem:[#allocation2 + $0xd8] sm:$0xff]
        %v443 = vld [vmem:[#allocation2 + $0xe0] sm:$0xff]
        %v444 = vld [vmem:[#allocation2 + $0xe8] sm:$0xff]
        %v445 = vld [vmem:[#allocation2 + $0xf0] sm:$0xff]
        %v446 = vld [vmem:[#allocation2 + $0xf8] sm:$0xff]
        %v447 = vld [vmem:[%s355] sm:$0xff]
        %v448 = vld [vmem:[%s355 + $0x8] sm:$0xff]
        %v449 = vld [vmem:[%s355 + $0x10] sm:$0xff]
        %v450 = vld [vmem:[%s355 + $0x18] sm:$0xff]
        %v451 = vld [vmem:[%s355 + $0x20] sm:$0xff]
        %v452 = vld [vmem:[%s355 + $0x28] sm:$0xff]
        %v453 = vld [vmem:[%s355 + $0x30] sm:$0xff]
        %v454 = vld [vmem:[%s355 + $0x38] sm:$0xff]
        %v455 = vld [vmem:[%s355 + $0x40] sm:$0xff]
        %v456 = vld [vmem:[%s355 + $0x48] sm:$0xff]
        %v457 = vld [vmem:[%s355 + $0x50] sm:$0xff]
        %v458 = vld [vmem:[%s355 + $0x58] sm:$0xff]
        %v459 = vld [vmem:[%s355 + $0x60] sm:$0xff]
        %v460 = vld [vmem:[%s355 + $0x68] sm:$0xff]
        %v461 = vld [vmem:[%s355 + $0x70] sm:$0xff]
        %v462 = vld [vmem:[%s355 + $0x78] sm:$0xff]
        %v463 = vld [vmem:[%s355 + $0x80] sm:$0xff]
        %v464 = vld [vmem:[%s355 + $0x88] sm:$0xff]
        %v465 = vld [vmem:[%s355 + $0x90] sm:$0xff]
        %v466 = vld [vmem:[%s355 + $0x98] sm:$0xff]
        %v467 = vld [vmem:[%s355 + $0xa0] sm:$0xff]
        %v468 = vld [vmem:[%s355 + $0xa8] sm:$0xff]
        %v469 = vld [vmem:[%s355 + $0xb0] sm:$0xff]
        %v470 = vld [vmem:[%s355 + $0xb8] sm:$0xff]
        %v471 = vld [vmem:[%s355 + $0xc0] sm:$0xff]
        %v472 = vld [vmem:[%s355 + $0xc8] sm:$0xff]
        %v473 = vld [vmem:[%s355 + $0xd0] sm:$0xff]
        %v474 = vld [vmem:[%s355 + $0xd8] sm:$0xff]
        %v475 = vld [vmem:[%s355 + $0xe0] sm:$0xff]
        %v476 = vld [vmem:[%s355 + $0xe8] sm:$0xff]
        %v477 = vld [vmem:[%s355 + $0xf0] sm:$0xff]
        %v478 = vld [vmem:[%s355 + $0xf8] sm:$0xff]
        %v479 = vunpack.c.l.s8.bf16 %v447
        %v480 = vunpack.c.l.s8.bf16 %v448
        %v481 = vunpack.c.l.s8.bf16 %v449
        %v482 = vunpack.c.l.s8.bf16 %v450
        %v483 = vunpack.c.h.s8.bf16 %v447
        %v484 = vunpack.c.h.s8.bf16 %v448
        %v485 = vunpack.c.h.s8.bf16 %v449
        %v486 = vunpack.c.h.s8.bf16 %v450
        %v487 = vunpack.c.l.s8.bf16 %v451
        %v488 = vunpack.c.l.s8.bf16 %v452
        %v489 = vunpack.c.l.s8.bf16 %v453
        %v490 = vunpack.c.l.s8.bf16 %v454
        %v491 = vunpack.c.h.s8.bf16 %v451
        %v492 = vunpack.c.h.s8.bf16 %v452
        %v493 = vunpack.c.h.s8.bf16 %v453
        %v494 = vunpack.c.h.s8.bf16 %v454
        %v495 = vunpack.c.l.s8.bf16 %v455
        %v496 = vunpack.c.l.s8.bf16 %v456
        %v497 = vunpack.c.l.s8.bf16 %v457
        %v498 = vunpack.c.l.s8.bf16 %v458
        %v499 = vunpack.c.h.s8.bf16 %v455
        %v500 = vunpack.c.h.s8.bf16 %v456
        %v501 = vunpack.c.h.s8.bf16 %v457
        %v502 = vunpack.c.h.s8.bf16 %v458
        %v503 = vunpack.c.l.s8.bf16 %v459
        %v504 = vunpack.c.l.s8.bf16 %v460
        %v505 = vunpack.c.l.s8.bf16 %v461
        %v506 = vunpack.c.l.s8.bf16 %v462
        %v507 = vunpack.c.h.s8.bf16 %v459
        %v508 = vunpack.c.h.s8.bf16 %v460
        %v509 = vunpack.c.h.s8.bf16 %v461
        %v510 = vunpack.c.h.s8.bf16 %v462
        %v511 = vunpack.c.l.s8.bf16 %v463
        %v512 = vunpack.c.l.s8.bf16 %v464
        %v513 = vunpack.c.l.s8.bf16 %v465
        %v514 = vunpack.c.l.s8.bf16 %v466
        %v515 = vunpack.c.h.s8.bf16 %v463
        %v516 = vunpack.c.h.s8.bf16 %v464
        %v517 = vunpack.c.h.s8.bf16 %v465
        %v518 = vunpack.c.h.s8.bf16 %v466
        %v519 = vunpack.c.l.s8.bf16 %v467
        %v520 = vunpack.c.l.s8.bf16 %v468
        %v521 = vunpack.c.l.s8.bf16 %v469
        %v522 = vunpack.c.l.s8.bf16 %v470
        %v523 = vunpack.c.h.s8.bf16 %v467
        %v524 = vunpack.c.h.s8.bf16 %v468
        %v525 = vunpack.c.h.s8.bf16 %v469
        %v526 = vunpack.c.h.s8.bf16 %v470
        %v527 = vunpack.c.l.s8.bf16 %v471
        %v528 = vunpack.c.l.s8.bf16 %v472
        %v529 = vunpack.c.l.s8.bf16 %v473
        %v530 = vunpack.c.l.s8.bf16 %v474
        %v531 = vunpack.c.h.s8.bf16 %v471
        %v532 = vunpack.c.h.s8.bf16 %v472
        %v533 = vunpack.c.h.s8.bf16 %v473
        %v534 = vunpack.c.h.s8.bf16 %v474
        %v535 = vunpack.c.l.s8.bf16 %v475
        %v536 = vunpack.c.l.s8.bf16 %v476
        %v537 = vunpack.c.l.s8.bf16 %v477
        %v538 = vunpack.c.l.s8.bf16 %v478
        %v539 = vunpack.c.h.s8.bf16 %v475
        %v540 = vunpack.c.h.s8.bf16 %v476
        %v541 = vunpack.c.h.s8.bf16 %v477
        %v542 = vunpack.c.h.s8.bf16 %v478
        %v543 = vld [vmem:[%s362] sm:$0xf]
        %v544 = vld [vmem:[%s362 + $0x4] sm:$0xf]
        %v545 = vld [vmem:[%s362 + $0x8] sm:$0xf]
        %v546 = vld [vmem:[%s362 + $0xc] sm:$0xf]
        %v547 = vld [vmem:[%s362 + $0x10] sm:$0xf]
        %v548 = vld [vmem:[%s362 + $0x14] sm:$0xf]
        %v549 = vld [vmem:[%s362 + $0x18] sm:$0xf]
        %v550 = vld [vmem:[%s362 + $0x1c] sm:$0xf]
        %v551 = vld [vmem:[%s362 + $0x20] sm:$0xf]
        %v552 = vld [vmem:[%s362 + $0x24] sm:$0xf]
        %v553 = vld [vmem:[%s362 + $0x28] sm:$0xf]
        %v554 = vld [vmem:[%s362 + $0x2c] sm:$0xf]
        %v555 = vld [vmem:[%s362 + $0x30] sm:$0xf]
        %v556 = vld [vmem:[%s362 + $0x34] sm:$0xf]
        %v557 = vld [vmem:[%s362 + $0x38] sm:$0xf]
        %v558 = vld [vmem:[%s362 + $0x3c] sm:$0xf]
        %v559 = vld [vmem:[%s362 + $0x40] sm:$0xf]
        %v560 = vld [vmem:[%s362 + $0x44] sm:$0xf]
        %v561 = vld [vmem:[%s362 + $0x48] sm:$0xf]
        %v562 = vld [vmem:[%s362 + $0x4c] sm:$0xf]
        %v563 = vld [vmem:[%s362 + $0x50] sm:$0xf]
        %v564 = vld [vmem:[%s362 + $0x54] sm:$0xf]
        %v565 = vld [vmem:[%s362 + $0x58] sm:$0xf]
        %v566 = vld [vmem:[%s362 + $0x5c] sm:$0xf]
        %v567 = vld [vmem:[%s362 + $0x60] sm:$0xf]
        %v568 = vld [vmem:[%s362 + $0x64] sm:$0xf]
        %v569 = vld [vmem:[%s362 + $0x68] sm:$0xf]
        %v570 = vld [vmem:[%s362 + $0x6c] sm:$0xf]
        %v571 = vld [vmem:[%s362 + $0x70] sm:$0xf]
        %v572 = vld [vmem:[%s362 + $0x74] sm:$0xf]
        %v573 = vld [vmem:[%s362 + $0x78] sm:$0xf]
        %v574 = vld [vmem:[%s362 + $0x7c] sm:$0xf]
        %v575 = vld [vmem:[%s362 + $0x80] sm:$0xf]
        %v576 = vld [vmem:[%s362 + $0x84] sm:$0xf]
        %v577 = vld [vmem:[%s362 + $0x88] sm:$0xf]
        %v578 = vld [vmem:[%s362 + $0x8c] sm:$0xf]
        %v579 = vld [vmem:[%s362 + $0x90] sm:$0xf]
        %v580 = vld [vmem:[%s362 + $0x94] sm:$0xf]
        %v581 = vld [vmem:[%s362 + $0x98] sm:$0xf]
        %v582 = vld [vmem:[%s362 + $0x9c] sm:$0xf]
        %v583 = vld [vmem:[%s362 + $0xa0] sm:$0xf]
        %v584 = vld [vmem:[%s362 + $0xa4] sm:$0xf]
        %v585 = vld [vmem:[%s362 + $0xa8] sm:$0xf]
        %v586 = vld [vmem:[%s362 + $0xac] sm:$0xf]
        %v587 = vld [vmem:[%s362 + $0xb0] sm:$0xf]
        %v588 = vld [vmem:[%s362 + $0xb4] sm:$0xf]
        %v589 = vld [vmem:[%s362 + $0xb8] sm:$0xf]
        %v590 = vld [vmem:[%s362 + $0xbc] sm:$0xf]
        %v591 = vld [vmem:[%s362 + $0xc0] sm:$0xf]
        %v592 = vld [vmem:[%s362 + $0xc4] sm:$0xf]
        %v593 = vld [vmem:[%s362 + $0xc8] sm:$0xf]
        %v594 = vld [vmem:[%s362 + $0xcc] sm:$0xf]
        %v595 = vld [vmem:[%s362 + $0xd0] sm:$0xf]
        %v596 = vld [vmem:[%s362 + $0xd4] sm:$0xf]
        %v597 = vld [vmem:[%s362 + $0xd8] sm:$0xf]
        %v598 = vld [vmem:[%s362 + $0xdc] sm:$0xf]
        %v599 = vld [vmem:[%s362 + $0xe0] sm:$0xf]
        %v600 = vld [vmem:[%s362 + $0xe4] sm:$0xf]
        %v601 = vld [vmem:[%s362 + $0xe8] sm:$0xf]
        %v602 = vld [vmem:[%s362 + $0xec] sm:$0xf]
        %v603 = vld [vmem:[%s362 + $0xf0] sm:$0xf]
        %v604 = vld [vmem:[%s362 + $0xf4] sm:$0xf]
        %v605 = vld [vmem:[%s362 + $0xf8] sm:$0xf]
        %v606 = vld [vmem:[%s362 + $0xfc] sm:$0xf]
        %v671 = vunpack.c.l.b16 %v543
        %v672 = vunpack.c.l.b16 %v544
        %v673 = vunpack.c.l.b16 %v545
        %v674 = vunpack.c.l.b16 %v546
        %v675 = vunpack.c.l.b16 %v547
        %v676 = vunpack.c.l.b16 %v548
        %v677 = vunpack.c.l.b16 %v549
        %v678 = vunpack.c.l.b16 %v550
        %v679 = vunpack.c.l.b16 %v551
        %v680 = vunpack.c.l.b16 %v552
        %v681 = vunpack.c.l.b16 %v553
        %v682 = vunpack.c.l.b16 %v554
        %v683 = vunpack.c.l.b16 %v555
        %v684 = vunpack.c.l.b16 %v556
        %v685 = vunpack.c.l.b16 %v557
        %v686 = vunpack.c.l.b16 %v558
        %v687 = vunpack.c.l.b16 %v559
        %v688 = vunpack.c.l.b16 %v560
        %v689 = vunpack.c.l.b16 %v561
        %v690 = vunpack.c.l.b16 %v562
        %v691 = vunpack.c.l.b16 %v563
        %v692 = vunpack.c.l.b16 %v564
        %v693 = vunpack.c.l.b16 %v565
        %v694 = vunpack.c.l.b16 %v566
        %v695 = vunpack.c.l.b16 %v567
        %v696 = vunpack.c.l.b16 %v568
        %v697 = vunpack.c.l.b16 %v569
        %v698 = vunpack.c.l.b16 %v570
        %v699 = vunpack.c.l.b16 %v571
        %v700 = vunpack.c.l.b16 %v572
        %v701 = vunpack.c.l.b16 %v573
        %v702 = vunpack.c.l.b16 %v574
        %v703 = vunpack.c.l.b16 %v575
        %v704 = vunpack.c.l.b16 %v576
        %v705 = vunpack.c.l.b16 %v577
        %v706 = vunpack.c.l.b16 %v578
        %v707 = vunpack.c.l.b16 %v579
        %v708 = vunpack.c.l.b16 %v580
        %v709 = vunpack.c.l.b16 %v581
        %v710 = vunpack.c.l.b16 %v582
        %v711 = vunpack.c.l.b16 %v583
        %v712 = vunpack.c.l.b16 %v584
        %v713 = vunpack.c.l.b16 %v585
        %v714 = vunpack.c.l.b16 %v586
        %v715 = vunpack.c.l.b16 %v587
        %v716 = vunpack.c.l.b16 %v588
        %v717 = vunpack.c.l.b16 %v589
        %v718 = vunpack.c.l.b16 %v590
        %v719 = vunpack.c.l.b16 %v591
        %v720 = vunpack.c.l.b16 %v592
        %v721 = vunpack.c.l.b16 %v593
        %v722 = vunpack.c.l.b16 %v594
        %v723 = vunpack.c.l.b16 %v595
        %v724 = vunpack.c.l.b16 %v596
        %v725 = vunpack.c.l.b16 %v597
        %v726 = vunpack.c.l.b16 %v598
        %v727 = vunpack.c.l.b16 %v599
        %v728 = vunpack.c.l.b16 %v600
        %v729 = vunpack.c.l.b16 %v601
        %v730 = vunpack.c.l.b16 %v602
        %v731 = vunpack.c.l.b16 %v603
        %v732 = vunpack.c.l.b16 %v604
        %v733 = vunpack.c.l.b16 %v605
        %v734 = vunpack.c.l.b16 %v606
        %v735 = vpack.c.b16 %v672, %v671
        %v736 = vpack.c.b16 %v674, %v673
        %v737 = vpack.c.b16 %v676, %v675
        %v738 = vpack.c.b16 %v678, %v677
        %v739 = vpack.c.b16 %v680, %v679
        %v740 = vpack.c.b16 %v682, %v681
        %v741 = vpack.c.b16 %v684, %v683
        %v742 = vpack.c.b16 %v686, %v685
        %v743 = vpack.c.b16 %v688, %v687
        %v744 = vpack.c.b16 %v690, %v689
        %v745 = vpack.c.b16 %v692, %v691
        %v746 = vpack.c.b16 %v694, %v693
        %v747 = vpack.c.b16 %v696, %v695
        %v748 = vpack.c.b16 %v698, %v697
        %v749 = vpack.c.b16 %v700, %v699
        %v750 = vpack.c.b16 %v702, %v701
        %v751 = vpack.c.b16 %v704, %v703
        %v752 = vpack.c.b16 %v706, %v705
        %v753 = vpack.c.b16 %v708, %v707
        %v754 = vpack.c.b16 %v710, %v709
        %v755 = vpack.c.b16 %v712, %v711
        %v756 = vpack.c.b16 %v714, %v713
        %v757 = vpack.c.b16 %v716, %v715
        %v758 = vpack.c.b16 %v718, %v717
        %v759 = vpack.c.b16 %v720, %v719
        %v760 = vpack.c.b16 %v722, %v721
        %v761 = vpack.c.b16 %v724, %v723
        %v762 = vpack.c.b16 %v726, %v725
        %v763 = vpack.c.b16 %v728, %v727
        %v764 = vpack.c.b16 %v730, %v729
        %v765 = vpack.c.b16 %v732, %v731
        %v766 = vpack.c.b16 %v734, %v733
        %799 = vmatprep.subr.bf16.mxu0 0
        %800 = vmatpush1.bf16.msra.mxu0 %v735
        %801 = vmatprep.subr.bf16.mxu0 0
        %802 = vmatpush1.bf16.msra.mxu0 %v736
        %803 = vmatprep.subr.bf16.mxu0 0
        %804 = vmatpush1.bf16.msra.mxu0 %v737
        %805 = vmatprep.subr.bf16.mxu0 0
        %806 = vmatpush1.bf16.msra.mxu0 %v738
        %807 = vmatprep.subr.bf16.mxu0 0
        %808 = vmatpush1.bf16.msra.mxu0 %v739
        %809 = vmatprep.subr.bf16.mxu0 0
        %810 = vmatpush1.bf16.msra.mxu0 %v740
        %811 = vmatprep.subr.bf16.mxu0 0
        %812 = vmatpush1.bf16.msra.mxu0 %v741
        %813 = vmatprep.subr.bf16.mxu0 0
        %814 = vmatpush1.bf16.msra.mxu0 %v742
        %815 = vmatprep.subr.bf16.mxu0 0
        %816 = vmatpush1.bf16.msra.mxu0 %v743
        %817 = vmatprep.subr.bf16.mxu0 0
        %818 = vmatpush1.bf16.msra.mxu0 %v744
        %819 = vmatprep.subr.bf16.mxu0 0
        %820 = vmatpush1.bf16.msra.mxu0 %v745
        %821 = vmatprep.subr.bf16.mxu0 0
        %822 = vmatpush1.bf16.msra.mxu0 %v746
        %823 = vmatprep.subr.bf16.mxu0 0
        %824 = vmatpush1.bf16.msra.mxu0 %v747
        %825 = vmatprep.subr.bf16.mxu0 0
        %826 = vmatpush1.bf16.msra.mxu0 %v748
        %827 = vmatprep.subr.bf16.mxu0 0
        %828 = vmatpush1.bf16.msra.mxu0 %v749
        %829 = vmatprep.subr.bf16.mxu0 0
        %830 = vmatpush1.bf16.msra.mxu0 %v750
        %831 = vmatprep.mubr.bf16.mxu0 %v480
        %832 = vmatmul.mubr.bf16.gmra.mrb[0].mxu0 %v479
        %v833 = vpop.f32.mrb[0].mxu0
        %v834 = vadd.f32 0.0, %v833
        %v835 = vpop.f32.mrb[0].mxu0
        %v836 = vpop.f32.mrb[0].mxu0
        %v837 = vadd.f32 0.0, %v836
        %v838 = vpop.f32.mrb[0].mxu0
        %839 = vmatprep.mubr.bf16.mxu0 %v484
        %840 = vmatmul.mubr.bf16.gmra.mrb[0].mxu0 %v483
        %v841 = vpop.f32.mrb[0].mxu0
        %v842 = vadd.f32 0.0, %v841
        %v843 = vpop.f32.mrb[0].mxu0
        %v844 = vpop.f32.mrb[0].mxu0
        %v845 = vadd.f32 0.0, %v844
        %v846 = vpop.f32.mrb[0].mxu0
        %847 = vmatprep.mubr.bf16.mxu0 %v488
        %848 = vmatmul.mubr.bf16.gmra.mrb[0].mxu0 %v487
        %v849 = vpop.f32.mrb[0].mxu0
        %v850 = vadd.f32 0.0, %v849
        %v851 = vpop.f32.mrb[0].mxu0
        %v852 = vpop.f32.mrb[0].mxu0
        %v853 = vadd.f32 0.0, %v852
        %v854 = vpop.f32.mrb[0].mxu0
        %855 = vmatprep.mubr.bf16.mxu0 %v492
        %856 = vmatmul.mubr.bf16.gmra.mrb[0].mxu0 %v491
        %v857 = vpop.f32.mrb[0].mxu0
        %v858 = vadd.f32 0.0, %v857
        %v859 = vpop.f32.mrb[0].mxu0
        %v860 = vpop.f32.mrb[0].mxu0
        %v861 = vadd.f32 0.0, %v860
        %v862 = vpop.f32.mrb[0].mxu0
        %863 = vmatprep.mubr.bf16.mxu0 %v496
        %864 = vmatmul.mubr.bf16.gmra.mrb[0].mxu0 %v495
        %v865 = vpop.f32.mrb[0].mxu0
        %v866 = vadd.f32 0.0, %v865
        %v867 = vpop.f32.mrb[0].mxu0
        %v868 = vpop.f32.mrb[0].mxu0
        %v869 = vadd.f32 0.0, %v868
        %v870 = vpop.f32.mrb[0].mxu0
        %871 = vmatprep.mubr.bf16.mxu0 %v500
        %872 = vmatmul.mubr.bf16.gmra.mrb[0].mxu0 %v499
        %v873 = vpop.f32.mrb[0].mxu0
        %v874 = vadd.f32 0.0, %v873
        %v875 = vpop.f32.mrb[0].mxu0
        %v876 = vpop.f32.mrb[0].mxu0
        %v877 = vadd.f32 0.0, %v876
        %v878 = vpop.f32.mrb[0].mxu0
        %879 = vmatprep.mubr.bf16.mxu0 %v504
        %880 = vmatmul.mubr.bf16.gmra.mrb[0].mxu0 %v503
        %v881 = vpop.f32.mrb[0].mxu0
        %v882 = vadd.f32 0.0, %v881
        %v883 = vpop.f32.mrb[0].mxu0
        %v884 = vpop.f32.mrb[0].mxu0
        %v885 = vadd.f32 0.0, %v884
        %v886 = vpop.f32.mrb[0].mxu0
        %887 = vmatprep.mubr.bf16.mxu0 %v508
        %888 = vmatmul.mubr.bf16.gmra.mrb[0].mxu0 %v507
        %v889 = vpop.f32.mrb[0].mxu0
        %v890 = vadd.f32 0.0, %v889
        %v891 = vpop.f32.mrb[0].mxu0
        %v892 = vpop.f32.mrb[0].mxu0
        %v893 = vadd.f32 0.0, %v892
        %v894 = vpop.f32.mrb[0].mxu0
        %895 = vmatprep.mubr.bf16.mxu0 %v512
        %896 = vmatmul.mubr.bf16.gmra.mrb[0].mxu0 %v511
        %v897 = vpop.f32.mrb[0].mxu0
        %v898 = vadd.f32 0.0, %v897
        %v899 = vpop.f32.mrb[0].mxu0
        %v900 = vpop.f32.mrb[0].mxu0
        %v901 = vadd.f32 0.0, %v900
        %v902 = vpop.f32.mrb[0].mxu0
        %903 = vmatprep.mubr.bf16.mxu0 %v516
        %904 = vmatmul.mubr.bf16.gmra.mrb[0].mxu0 %v515
        %v905 = vpop.f32.mrb[0].mxu0
        %v906 = vadd.f32 0.0, %v905
        %v907 = vpop.f32.mrb[0].mxu0
        %v908 = vpop.f32.mrb[0].mxu0
        %v909 = vadd.f32 0.0, %v908
        %v910 = vpop.f32.mrb[0].mxu0
        %911 = vmatprep.mubr.bf16.mxu0 %v520
        %912 = vmatmul.mubr.bf16.gmra.mrb[0].mxu0 %v519
        %v913 = vpop.f32.mrb[0].mxu0
        %v914 = vadd.f32 0.0, %v913
        %v915 = vpop.f32.mrb[0].mxu0
        %v916 = vpop.f32.mrb[0].mxu0
        %v917 = vadd.f32 0.0, %v916
        %v918 = vpop.f32.mrb[0].mxu0
        %919 = vmatprep.mubr.bf16.mxu0 %v524
        %920 = vmatmul.mubr.bf16.gmra.mrb[0].mxu0 %v523
        %v921 = vpop.f32.mrb[0].mxu0
        %v922 = vadd.f32 0.0, %v921
        %v923 = vpop.f32.mrb[0].mxu0
        %v924 = vpop.f32.mrb[0].mxu0
        %v925 = vadd.f32 0.0, %v924
        %v926 = vpop.f32.mrb[0].mxu0
        %927 = vmatprep.mubr.bf16.mxu0 %v528
        %928 = vmatmul.mubr.bf16.gmra.mrb[0].mxu0 %v527
        %v929 = vpop.f32.mrb[0].mxu0
        %v930 = vadd.f32 0.0, %v929
        %v931 = vpop.f32.mrb[0].mxu0
        %v932 = vpop.f32.mrb[0].mxu0
        %v933 = vadd.f32 0.0, %v932
        %v934 = vpop.f32.mrb[0].mxu0
        %935 = vmatprep.mubr.bf16.mxu0 %v532
        %936 = vmatmul.mubr.bf16.gmra.mrb[0].mxu0 %v531
        %v937 = vpop.f32.mrb[0].mxu0
        %v938 = vadd.f32 0.0, %v937
        %v939 = vpop.f32.mrb[0].mxu0
        %v940 = vpop.f32.mrb[0].mxu0
        %v941 = vadd.f32 0.0, %v940
        %v942 = vpop.f32.mrb[0].mxu0
        %943 = vmatprep.mubr.bf16.mxu0 %v536
        %944 = vmatmul.mubr.bf16.gmra.mrb[0].mxu0 %v535
        %v945 = vpop.f32.mrb[0].mxu0
        %v946 = vadd.f32 0.0, %v945
        %v947 = vpop.f32.mrb[0].mxu0
        %v948 = vpop.f32.mrb[0].mxu0
        %v949 = vadd.f32 0.0, %v948
        %v950 = vpop.f32.mrb[0].mxu0
        %951 = vmatprep.mubr.bf16.mxu0 %v540
        %952 = vmatmul.mubr.bf16.gmra.mrb[0].mxu0 %v539
        %v953 = vpop.f32.mrb[0].mxu0
        %v954 = vadd.f32 0.0, %v953
        %v955 = vpop.f32.mrb[0].mxu0
        %v956 = vpop.f32.mrb[0].mxu0
        %v957 = vadd.f32 0.0, %v956
        %v958 = vpop.f32.mrb[0].mxu0
        %959 = vdwg.mxu0
        %960 = vmatprep.subr.bf16.mxu0 0
        %961 = vmatpush1.bf16.msra.mxu0 %v751
        %962 = vmatprep.subr.bf16.mxu0 0
        %963 = vmatpush1.bf16.msra.mxu0 %v752
        %964 = vmatprep.subr.bf16.mxu0 0
        %965 = vmatpush1.bf16.msra.mxu0 %v753
        %966 = vmatprep.subr.bf16.mxu0 0
        %967 = vmatpush1.bf16.msra.mxu0 %v754
        %968 = vmatprep.subr.bf16.mxu0 0
        %969 = vmatpush1.bf16.msra.mxu0 %v755
        %970 = vmatprep.subr.bf16.mxu0 0
        %971 = vmatpush1.bf16.msra.mxu0 %v756
        %972 = vmatprep.subr.bf16.mxu0 0
        %973 = vmatpush1.bf16.msra.mxu0 %v757
        %974 = vmatprep.subr.bf16.mxu0 0
        %975 = vmatpush1.bf16.msra.mxu0 %v758
        %976 = vmatprep.subr.bf16.mxu0 0
        %977 = vmatpush1.bf16.msra.mxu0 %v759
        %978 = vmatprep.subr.bf16.mxu0 0
        %979 = vmatpush1.bf16.msra.mxu0 %v760
        %980 = vmatprep.subr.bf16.mxu0 0
        %981 = vmatpush1.bf16.msra.mxu0 %v761
        %982 = vmatprep.subr.bf16.mxu0 0
        %983 = vmatpush1.bf16.msra.mxu0 %v762
        %984 = vmatprep.subr.bf16.mxu0 0
        %985 = vmatpush1.bf16.msra.mxu0 %v763
        %986 = vmatprep.subr.bf16.mxu0 0
        %987 = vmatpush1.bf16.msra.mxu0 %v764
        %988 = vmatprep.subr.bf16.mxu0 0
        %989 = vmatpush1.bf16.msra.mxu0 %v765
        %990 = vmatprep.subr.bf16.mxu0 0
        %991 = vmatpush1.bf16.msra.mxu0 %v766
        %992 = vmatprep.mubr.bf16.mxu0 %v482
        %993 = vmatmul.mubr.bf16.gmra.mrb[0].mxu0 %v481
        %v994 = vpop.f32.mrb[0].mxu0
        %v995 = vadd.f32 %v834, %v994
        %v996 = vpop.f32.mrb[0].mxu0
        %v997 = vpop.f32.mrb[0].mxu0
        %v998 = vadd.f32 %v837, %v997
        %v999 = vpop.f32.mrb[0].mxu0
        %1000 = vmatprep.mubr.bf16.mxu0 %v486
        %1001 = vmatmul.mubr.bf16.gmra.mrb[0].mxu0 %v485
        %v1002 = vpop.f32.mrb[0].mxu0
        %v1003 = vadd.f32 %v842, %v1002
        %v1004 = vpop.f32.mrb[0].mxu0
        %v1005 = vpop.f32.mrb[0].mxu0
        %v1006 = vadd.f32 %v845, %v1005
        %v1007 = vpop.f32.mrb[0].mxu0
        %1008 = vmatprep.mubr.bf16.mxu0 %v490
        %1009 = vmatmul.mubr.bf16.gmra.mrb[0].mxu0 %v489
        %v1010 = vpop.f32.mrb[0].mxu0
        %v1011 = vadd.f32 %v850, %v1010
        %v1012 = vpop.f32.mrb[0].mxu0
        %v1013 = vpop.f32.mrb[0].mxu0
        %v1014 = vadd.f32 %v853, %v1013
        %v1015 = vpop.f32.mrb[0].mxu0
        %1016 = vmatprep.mubr.bf16.mxu0 %v494
        %1017 = vmatmul.mubr.bf16.gmra.mrb[0].mxu0 %v493
        %v1018 = vpop.f32.mrb[0].mxu0
        %v1019 = vadd.f32 %v858, %v1018
        %v1020 = vpop.f32.mrb[0].mxu0
        %v1021 = vpop.f32.mrb[0].mxu0
        %v1022 = vadd.f32 %v861, %v1021
        %v1023 = vpop.f32.mrb[0].mxu0
        %1024 = vmatprep.mubr.bf16.mxu0 %v498
        %1025 = vmatmul.mubr.bf16.gmra.mrb[0].mxu0 %v497
        %v1026 = vpop.f32.mrb[0].mxu0
        %v1027 = vadd.f32 %v866, %v1026
        %v1028 = vpop.f32.mrb[0].mxu0
        %v1029 = vpop.f32.mrb[0].mxu0
        %v1030 = vadd.f32 %v869, %v1029
        %v1031 = vpop.f32.mrb[0].mxu0
        %1032 = vmatprep.mubr.bf16.mxu0 %v502
        %1033 = vmatmul.mubr.bf16.gmra.mrb[0].mxu0 %v501
        %v1034 = vpop.f32.mrb[0].mxu0
        %v1035 = vadd.f32 %v874, %v1034
        %v1036 = vpop.f32.mrb[0].mxu0
        %v1037 = vpop.f32.mrb[0].mxu0
        %v1038 = vadd.f32 %v877, %v1037
        %v1039 = vpop.f32.mrb[0].mxu0
        %1040 = vmatprep.mubr.bf16.mxu0 %v506
        %1041 = vmatmul.mubr.bf16.gmra.mrb[0].mxu0 %v505
        %v1042 = vpop.f32.mrb[0].mxu0
        %v1043 = vadd.f32 %v882, %v1042
        %v1044 = vpop.f32.mrb[0].mxu0
        %v1045 = vpop.f32.mrb[0].mxu0
        %v1046 = vadd.f32 %v885, %v1045
        %v1047 = vpop.f32.mrb[0].mxu0
        %1048 = vmatprep.mubr.bf16.mxu0 %v510
        %1049 = vmatmul.mubr.bf16.gmra.mrb[0].mxu0 %v509
        %v1050 = vpop.f32.mrb[0].mxu0
        %v1051 = vadd.f32 %v890, %v1050
        %v1052 = vpop.f32.mrb[0].mxu0
        %v1053 = vpop.f32.mrb[0].mxu0
        %v1054 = vadd.f32 %v893, %v1053
        %v1055 = vpop.f32.mrb[0].mxu0
        %1056 = vmatprep.mubr.bf16.mxu0 %v514
        %1057 = vmatmul.mubr.bf16.gmra.mrb[0].mxu0 %v513
        %v1058 = vpop.f32.mrb[0].mxu0
        %v1059 = vadd.f32 %v898, %v1058
        %v1060 = vpop.f32.mrb[0].mxu0
        %v1061 = vpop.f32.mrb[0].mxu0
        %v1062 = vadd.f32 %v901, %v1061
        %v1063 = vpop.f32.mrb[0].mxu0
        %1064 = vmatprep.mubr.bf16.mxu0 %v518
        %1065 = vmatmul.mubr.bf16.gmra.mrb[0].mxu0 %v517
        %v1066 = vpop.f32.mrb[0].mxu0
        %v1067 = vadd.f32 %v906, %v1066
        %v1068 = vpop.f32.mrb[0].mxu0
        %v1069 = vpop.f32.mrb[0].mxu0
        %v1070 = vadd.f32 %v909, %v1069
        %v1071 = vpop.f32.mrb[0].mxu0
        %1072 = vmatprep.mubr.bf16.mxu0 %v522
        %1073 = vmatmul.mubr.bf16.gmra.mrb[0].mxu0 %v521
        %v1074 = vpop.f32.mrb[0].mxu0
        %v1075 = vadd.f32 %v914, %v1074
        %v1076 = vpop.f32.mrb[0].mxu0
        %v1077 = vpop.f32.mrb[0].mxu0
        %v1078 = vadd.f32 %v917, %v1077
        %v1079 = vpop.f32.mrb[0].mxu0
        %1080 = vmatprep.mubr.bf16.mxu0 %v526
        %1081 = vmatmul.mubr.bf16.gmra.mrb[0].mxu0 %v525
        %v1082 = vpop.f32.mrb[0].mxu0
        %v1083 = vadd.f32 %v922, %v1082
        %v1084 = vpop.f32.mrb[0].mxu0
        %v1085 = vpop.f32.mrb[0].mxu0
        %v1086 = vadd.f32 %v925, %v1085
        %v1087 = vpop.f32.mrb[0].mxu0
        %1088 = vmatprep.mubr.bf16.mxu0 %v530
        %1089 = vmatmul.mubr.bf16.gmra.mrb[0].mxu0 %v529
        %v1090 = vpop.f32.mrb[0].mxu0
        %v1091 = vadd.f32 %v930, %v1090
        %v1092 = vpop.f32.mrb[0].mxu0
        %v1093 = vpop.f32.mrb[0].mxu0
        %v1094 = vadd.f32 %v933, %v1093
        %v1095 = vpop.f32.mrb[0].mxu0
        %1096 = vmatprep.mubr.bf16.mxu0 %v534
        %1097 = vmatmul.mubr.bf16.gmra.mrb[0].mxu0 %v533
        %v1098 = vpop.f32.mrb[0].mxu0
        %v1099 = vadd.f32 %v938, %v1098
        %v1100 = vpop.f32.mrb[0].mxu0
        %v1101 = vpop.f32.mrb[0].mxu0
        %v1102 = vadd.f32 %v941, %v1101
        %v1103 = vpop.f32.mrb[0].mxu0
        %1104 = vmatprep.mubr.bf16.mxu0 %v538
        %1105 = vmatmul.mubr.bf16.gmra.mrb[0].mxu0 %v537
        %v1106 = vpop.f32.mrb[0].mxu0
        %v1107 = vadd.f32 %v946, %v1106
        %v1108 = vpop.f32.mrb[0].mxu0
        %v1109 = vpop.f32.mrb[0].mxu0
        %v1110 = vadd.f32 %v949, %v1109
        %v1111 = vpop.f32.mrb[0].mxu0
        %1112 = vmatprep.mubr.bf16.mxu0 %v542
        %1113 = vmatmul.mubr.bf16.gmra.mrb[0].mxu0 %v541
        %v1114 = vpop.f32.mrb[0].mxu0
        %v1115 = vadd.f32 %v954, %v1114
        %v1116 = vpop.f32.mrb[0].mxu0
        %v1117 = vpop.f32.mrb[0].mxu0
        %v1118 = vadd.f32 %v957, %v1117
        %v1119 = vpop.f32.mrb[0].mxu0
        %1120 = vdwg.mxu0
        %v1121 = vadd.f32 %v415, %v995
        %v1122 = vadd.f32 %v416, %v998
        %v1123 = vadd.f32 %v417, %v1003
        %v1124 = vadd.f32 %v418, %v1006
        %v1125 = vadd.f32 %v419, %v1011
        %v1126 = vadd.f32 %v420, %v1014
        %v1127 = vadd.f32 %v421, %v1019
        %v1128 = vadd.f32 %v422, %v1022
        %v1129 = vadd.f32 %v423, %v1027
        %v1130 = vadd.f32 %v424, %v1030
        %v1131 = vadd.f32 %v425, %v1035
        %v1132 = vadd.f32 %v426, %v1038
        %v1133 = vadd.f32 %v427, %v1043
        %v1134 = vadd.f32 %v428, %v1046
        %v1135 = vadd.f32 %v429, %v1051
        %v1136 = vadd.f32 %v430, %v1054
        %v1137 = vadd.f32 %v431, %v1059
        %v1138 = vadd.f32 %v432, %v1062
        %v1139 = vadd.f32 %v433, %v1067
        %v1140 = vadd.f32 %v434, %v1070
        %v1141 = vadd.f32 %v435, %v1075
        %v1142 = vadd.f32 %v436, %v1078
        %v1143 = vadd.f32 %v437, %v1083
        %v1144 = vadd.f32 %v438, %v1086
        %v1145 = vadd.f32 %v439, %v1091
        %v1146 = vadd.f32 %v440, %v1094
        %v1147 = vadd.f32 %v441, %v1099
        %v1148 = vadd.f32 %v442, %v1102
        %v1149 = vadd.f32 %v443, %v1107
        %v1150 = vadd.f32 %v444, %v1110
        %v1151 = vadd.f32 %v445, %v1115
        %v1152 = vadd.f32 %v446, %v1118
        %vm1153 = vcmask 130048
        %1154 = vst.msk [vmem:[#allocation2] sm:$0xff] %vm1153, %v1121
        %1155 = vst.msk [vmem:[#allocation2 + $0x8] sm:$0xff] %vm1153, %v1122
        %1156 = vst.msk [vmem:[#allocation2 + $0x10] sm:$0xff] %vm1153, %v1123
        %1157 = vst.msk [vmem:[#allocation2 + $0x18] sm:$0xff] %vm1153, %v1124
        %1158 = vst.msk [vmem:[#allocation2 + $0x20] sm:$0xff] %vm1153, %v1125
        %1159 = vst.msk [vmem:[#allocation2 + $0x28] sm:$0xff] %vm1153, %v1126
        %1160 = vst.msk [vmem:[#allocation2 + $0x30] sm:$0xff] %vm1153, %v1127
        %1161 = vst.msk [vmem:[#allocation2 + $0x38] sm:$0xff] %vm1153, %v1128
        %1162 = vst.msk [vmem:[#allocation2 + $0x40] sm:$0xff] %vm1153, %v1129
        %1163 = vst.msk [vmem:[#allocation2 + $0x48] sm:$0xff] %vm1153, %v1130
        %1164 = vst.msk [vmem:[#allocation2 + $0x50] sm:$0xff] %vm1153, %v1131
        %1165 = vst.msk [vmem:[#allocation2 + $0x58] sm:$0xff] %vm1153, %v1132
        %1166 = vst.msk [vmem:[#allocation2 + $0x60] sm:$0xff] %vm1153, %v1133
        %1167 = vst.msk [vmem:[#allocation2 + $0x68] sm:$0xff] %vm1153, %v1134
        %1168 = vst.msk [vmem:[#allocation2 + $0x70] sm:$0xff] %vm1153, %v1135
        %1169 = vst.msk [vmem:[#allocation2 + $0x78] sm:$0xff] %vm1153, %v1136
        %1170 = vst.msk [vmem:[#allocation2 + $0x80] sm:$0xff] %vm1153, %v1137
        %1171 = vst.msk [vmem:[#allocation2 + $0x88] sm:$0xff] %vm1153, %v1138
        %1172 = vst.msk [vmem:[#allocation2 + $0x90] sm:$0xff] %vm1153, %v1139
        %1173 = vst.msk [vmem:[#allocation2 + $0x98] sm:$0xff] %vm1153, %v1140
        %1174 = vst.msk [vmem:[#allocation2 + $0xa0] sm:$0xff] %vm1153, %v1141
        %1175 = vst.msk [vmem:[#allocation2 + $0xa8] sm:$0xff] %vm1153, %v1142
        %1176 = vst.msk [vmem:[#allocation2 + $0xb0] sm:$0xff] %vm1153, %v1143
        %1177 = vst.msk [vmem:[#allocation2 + $0xb8] sm:$0xff] %vm1153, %v1144
        %1178 = vst.msk [vmem:[#allocation2 + $0xc0] sm:$0xff] %vm1153, %v1145
        %1179 = vst.msk [vmem:[#allocation2 + $0xc8] sm:$0xff] %vm1153, %v1146
        %1180 = vst.msk [vmem:[#allocation2 + $0xd0] sm:$0xff] %vm1153, %v1147
        %1181 = vst.msk [vmem:[#allocation2 + $0xd8] sm:$0xff] %vm1153, %v1148
        %1182 = vst.msk [vmem:[#allocation2 + $0xe0] sm:$0xff] %vm1153, %v1149
        %1183 = vst.msk [vmem:[#allocation2 + $0xe8] sm:$0xff] %vm1153, %v1150
        %1184 = vst.msk [vmem:[#allocation2 + $0xf0] sm:$0xff] %vm1153, %v1151
        %1185 = vst.msk [vmem:[#allocation2 + $0xf8] sm:$0xff] %vm1153, %v1152
        // Predicated region
        $region53: #{tpu_custom_call.1} parent=47 // pred_check
          %p1186 = pneg %p378
        $region54: #{tpu_custom_call.1} parent=47 // pred_check_branch
          %1188 = sbr.rel (%p1186) target = $region56
        $region55: #{tpu_custom_call.1} parent=47 // pred_region
          %v1189 = vld [vmem:[#allocation2] sm:$0xff]
          %v1190 = vld [vmem:[#allocation2 + $0x8] sm:$0xff]
          %v1191 = vld [vmem:[#allocation2 + $0x10] sm:$0xff]
          %v1192 = vld [vmem:[#allocation2 + $0x18] sm:$0xff]
          %v1193 = vld [vmem:[#allocation2 + $0x20] sm:$0xff]
          %v1194 = vld [vmem:[#allocation2 + $0x28] sm:$0xff]
          %v1195 = vld [vmem:[#allocation2 + $0x30] sm:$0xff]
          %v1196 = vld [vmem:[#allocation2 + $0x38] sm:$0xff]
          %v1197 = vld [vmem:[#allocation2 + $0x40] sm:$0xff]
          %v1198 = vld [vmem:[#allocation2 + $0x48] sm:$0xff]
          %v1199 = vld [vmem:[#allocation2 + $0x50] sm:$0xff]
          %v1200 = vld [vmem:[#allocation2 + $0x58] sm:$0xff]
          %v1201 = vld [vmem:[#allocation2 + $0x60] sm:$0xff]
          %v1202 = vld [vmem:[#allocation2 + $0x68] sm:$0xff]
          %v1203 = vld [vmem:[#allocation2 + $0x70] sm:$0xff]
          %v1204 = vld [vmem:[#allocation2 + $0x78] sm:$0xff]
          %v1205 = vld [vmem:[#allocation2 + $0x80] sm:$0xff]
          %v1206 = vld [vmem:[#allocation2 + $0x88] sm:$0xff]
          %v1207 = vld [vmem:[#allocation2 + $0x90] sm:$0xff]
          %v1208 = vld [vmem:[#allocation2 + $0x98] sm:$0xff]
          %v1209 = vld [vmem:[#allocation2 + $0xa0] sm:$0xff]
          %v1210 = vld [vmem:[#allocation2 + $0xa8] sm:$0xff]
          %v1211 = vld [vmem:[#allocation2 + $0xb0] sm:$0xff]
          %v1212 = vld [vmem:[#allocation2 + $0xb8] sm:$0xff]
          %v1213 = vld [vmem:[#allocation2 + $0xc0] sm:$0xff]
          %v1214 = vld [vmem:[#allocation2 + $0xc8] sm:$0xff]
          %v1215 = vld [vmem:[#allocation2 + $0xd0] sm:$0xff]
          %v1216 = vld [vmem:[#allocation2 + $0xd8] sm:$0xff]
          %v1217 = vld [vmem:[#allocation2 + $0xe0] sm:$0xff]
          %v1218 = vld [vmem:[#allocation2 + $0xe8] sm:$0xff]
          %v1219 = vld [vmem:[#allocation2 + $0xf0] sm:$0xff]
          %v1220 = vld [vmem:[#allocation2 + $0xf8] sm:$0xff]
          %v1221 = vld [vmem:[%s374] sm:$0xff]
          %v1222 = vld [vmem:[%s374 + $0x8] sm:$0xff]
          %v1223 = vld [vmem:[%s374 + $0x10] sm:$0xff]
          %v1224 = vld [vmem:[%s374 + $0x18] sm:$0xff]
          %v1225 = vld [vmem:[%s374 + $0x20] sm:$0xff]
          %v1226 = vld [vmem:[%s374 + $0x28] sm:$0xff]
          %v1227 = vld [vmem:[%s374 + $0x30] sm:$0xff]
          %v1228 = vld [vmem:[%s374 + $0x38] sm:$0xff]
          %v1229 = vld [vmem:[%s374 + $0x40] sm:$0xff]
          %v1230 = vld [vmem:[%s374 + $0x48] sm:$0xff]
          %v1231 = vld [vmem:[%s374 + $0x50] sm:$0xff]
          %v1232 = vld [vmem:[%s374 + $0x58] sm:$0xff]
          %v1233 = vld [vmem:[%s374 + $0x60] sm:$0xff]
          %v1234 = vld [vmem:[%s374 + $0x68] sm:$0xff]
          %v1235 = vld [vmem:[%s374 + $0x70] sm:$0xff]
          %v1236 = vld [vmem:[%s374 + $0x78] sm:$0xff]
          %v1237 = vld [vmem:[%s374 + $0x80] sm:$0xff]
          %v1238 = vld [vmem:[%s374 + $0x88] sm:$0xff]
          %v1239 = vld [vmem:[%s374 + $0x90] sm:$0xff]
          %v1240 = vld [vmem:[%s374 + $0x98] sm:$0xff]
          %v1241 = vld [vmem:[%s374 + $0xa0] sm:$0xff]
          %v1242 = vld [vmem:[%s374 + $0xa8] sm:$0xff]
          %v1243 = vld [vmem:[%s374 + $0xb0] sm:$0xff]
          %v1244 = vld [vmem:[%s374 + $0xb8] sm:$0xff]
          %v1245 = vld [vmem:[%s374 + $0xc0] sm:$0xff]
          %v1246 = vld [vmem:[%s374 + $0xc8] sm:$0xff]
          %v1247 = vld [vmem:[%s374 + $0xd0] sm:$0xff]
          %v1248 = vld [vmem:[%s374 + $0xd8] sm:$0xff]
          %v1249 = vld [vmem:[%s374 + $0xe0] sm:$0xff]
          %v1250 = vld [vmem:[%s374 + $0xe8] sm:$0xff]
          %v1251 = vld [vmem:[%s374 + $0xf0] sm:$0xff]
          %v1252 = vld [vmem:[%s374 + $0xf8] sm:$0xff]
          %1254 = vset.pattern.permute.xlu0 0
          %1255 = vperm.xlu0 %1254, %v1221
          %v1256 = vpop.permute.xlu0 %1255
          %1259 = vset.pattern.permute.xlu0 0
          %1260 = vperm.xlu0 %1259, %v1222
          %v1261 = vpop.permute.xlu0 %1260
          %1264 = vset.pattern.permute.xlu0 0
          %1265 = vperm.xlu0 %1264, %v1223
          %v1266 = vpop.permute.xlu0 %1265
          %1269 = vset.pattern.permute.xlu0 0
          %1270 = vperm.xlu0 %1269, %v1224
          %v1271 = vpop.permute.xlu0 %1270
          %1274 = vset.pattern.permute.xlu0 0
          %1275 = vperm.xlu0 %1274, %v1225
          %v1276 = vpop.permute.xlu0 %1275
          %1279 = vset.pattern.permute.xlu0 0
          %1280 = vperm.xlu0 %1279, %v1226
          %v1281 = vpop.permute.xlu0 %1280
          %1284 = vset.pattern.permute.xlu0 0
          %1285 = vperm.xlu0 %1284, %v1227
          %v1286 = vpop.permute.xlu0 %1285
          %1289 = vset.pattern.permute.xlu0 0
          %1290 = vperm.xlu0 %1289, %v1228
          %v1291 = vpop.permute.xlu0 %1290
          %1294 = vset.pattern.permute.xlu0 0
          %1295 = vperm.xlu0 %1294, %v1229
          %v1296 = vpop.permute.xlu0 %1295
          %1299 = vset.pattern.permute.xlu0 0
          %1300 = vperm.xlu0 %1299, %v1230
          %v1301 = vpop.permute.xlu0 %1300
          %1304 = vset.pattern.permute.xlu0 0
          %1305 = vperm.xlu0 %1304, %v1231
          %v1306 = vpop.permute.xlu0 %1305
          %1309 = vset.pattern.permute.xlu0 0
          %1310 = vperm.xlu0 %1309, %v1232
          %v1311 = vpop.permute.xlu0 %1310
          %1314 = vset.pattern.permute.xlu0 0
          %1315 = vperm.xlu0 %1314, %v1233
          %v1316 = vpop.permute.xlu0 %1315
          %1319 = vset.pattern.permute.xlu0 0
          %1320 = vperm.xlu0 %1319, %v1234
          %v1321 = vpop.permute.xlu0 %1320
          %1324 = vset.pattern.permute.xlu0 0
          %1325 = vperm.xlu0 %1324, %v1235
          %v1326 = vpop.permute.xlu0 %1325
          %1329 = vset.pattern.permute.xlu0 0
          %1330 = vperm.xlu0 %1329, %v1236
          %v1331 = vpop.permute.xlu0 %1330
          %1334 = vset.pattern.permute.xlu0 0
          %1335 = vperm.xlu0 %1334, %v1237
          %v1336 = vpop.permute.xlu0 %1335
          %1339 = vset.pattern.permute.xlu0 0
          %1340 = vperm.xlu0 %1339, %v1238
          %v1341 = vpop.permute.xlu0 %1340
          %1344 = vset.pattern.permute.xlu0 0
          %1345 = vperm.xlu0 %1344, %v1239
          %v1346 = vpop.permute.xlu0 %1345
          %1349 = vset.pattern.permute.xlu0 0
          %1350 = vperm.xlu0 %1349, %v1240
          %v1351 = vpop.permute.xlu0 %1350
          %1354 = vset.pattern.permute.xlu0 0
          %1355 = vperm.xlu0 %1354, %v1241
          %v1356 = vpop.permute.xlu0 %1355
          %1359 = vset.pattern.permute.xlu0 0
          %1360 = vperm.xlu0 %1359, %v1242
          %v1361 = vpop.permute.xlu0 %1360
          %1364 = vset.pattern.permute.xlu0 0
          %1365 = vperm.xlu0 %1364, %v1243
          %v1366 = vpop.permute.xlu0 %1365
          %1369 = vset.pattern.permute.xlu0 0
          %1370 = vperm.xlu0 %1369, %v1244
          %v1371 = vpop.permute.xlu0 %1370
          %1374 = vset.pattern.permute.xlu0 0
          %1375 = vperm.xlu0 %1374, %v1245
          %v1376 = vpop.permute.xlu0 %1375
          %1379 = vset.pattern.permute.xlu0 0
          %1380 = vperm.xlu0 %1379, %v1246
          %v1381 = vpop.permute.xlu0 %1380
          %1384 = vset.pattern.permute.xlu0 0
          %1385 = vperm.xlu0 %1384, %v1247
          %v1386 = vpop.permute.xlu0 %1385
          %1389 = vset.pattern.permute.xlu0 0
          %1390 = vperm.xlu0 %1389, %v1248
          %v1391 = vpop.permute.xlu0 %1390
          %1394 = vset.pattern.permute.xlu0 0
          %1395 = vperm.xlu0 %1394, %v1249
          %v1396 = vpop.permute.xlu0 %1395
          %1399 = vset.pattern.permute.xlu0 0
          %1400 = vperm.xlu0 %1399, %v1250
          %v1401 = vpop.permute.xlu0 %1400
          %1404 = vset.pattern.permute.xlu0 0
          %1405 = vperm.xlu0 %1404, %v1251
          %v1406 = vpop.permute.xlu0 %1405
          %1409 = vset.pattern.permute.xlu0 0
          %1410 = vperm.xlu0 %1409, %v1252
          %v1411 = vpop.permute.xlu0 %1410
          %v1413 = vmul.f32 %v1189, %v1256
          %v1414 = vmul.f32 %v1190, %v1261
          %v1415 = vmul.f32 %v1191, %v1266
          %v1416 = vmul.f32 %v1192, %v1271
          %v1417 = vmul.f32 %v1193, %v1276
          %v1418 = vmul.f32 %v1194, %v1281
          %v1419 = vmul.f32 %v1195, %v1286
          %v1420 = vmul.f32 %v1196, %v1291
          %v1421 = vmul.f32 %v1197, %v1296
          %v1422 = vmul.f32 %v1198, %v1301
          %v1423 = vmul.f32 %v1199, %v1306
          %v1424 = vmul.f32 %v1200, %v1311
          %v1425 = vmul.f32 %v1201, %v1316
          %v1426 = vmul.f32 %v1202, %v1321
          %v1427 = vmul.f32 %v1203, %v1326
          %v1428 = vmul.f32 %v1204, %v1331
          %v1429 = vmul.f32 %v1205, %v1336
          %v1430 = vmul.f32 %v1206, %v1341
          %v1431 = vmul.f32 %v1207, %v1346
          %v1432 = vmul.f32 %v1208, %v1351
          %v1433 = vmul.f32 %v1209, %v1356
          %v1434 = vmul.f32 %v1210, %v1361
          %v1435 = vmul.f32 %v1211, %v1366
          %v1436 = vmul.f32 %v1212, %v1371
          %v1437 = vmul.f32 %v1213, %v1376
          %v1438 = vmul.f32 %v1214, %v1381
          %v1439 = vmul.f32 %v1215, %v1386
          %v1440 = vmul.f32 %v1216, %v1391
          %v1441 = vmul.f32 %v1217, %v1396
          %v1442 = vmul.f32 %v1218, %v1401
          %v1443 = vmul.f32 %v1219, %v1406
          %v1444 = vmul.f32 %v1220, %v1411
          %v1445 = vld [vmem:[%s4] sm:$0xff]
          %v1446 = vld [vmem:[%s4 + $0x8] sm:$0xff]
          %v1447 = vld [vmem:[%s368] sm:$0xff]
          %v1448 = vld [vmem:[%s368 + $0x8] sm:$0xff]
          %v1449 = vld [vmem:[%s368 + $0x10] sm:$0xff]
          %v1450 = vld [vmem:[%s368 + $0x18] sm:$0xff]
          %v1451 = vld [vmem:[%s368 + $0x20] sm:$0xff]
          %v1452 = vld [vmem:[%s368 + $0x28] sm:$0xff]
          %v1453 = vld [vmem:[%s368 + $0x30] sm:$0xff]
          %v1454 = vld [vmem:[%s368 + $0x38] sm:$0xff]
          %v1455 = vld [vmem:[%s368 + $0x40] sm:$0xff]
          %v1456 = vld [vmem:[%s368 + $0x48] sm:$0xff]
          %v1457 = vld [vmem:[%s368 + $0x50] sm:$0xff]
          %v1458 = vld [vmem:[%s368 + $0x58] sm:$0xff]
          %v1459 = vld [vmem:[%s368 + $0x60] sm:$0xff]
          %v1460 = vld [vmem:[%s368 + $0x68] sm:$0xff]
          %v1461 = vld [vmem:[%s368 + $0x70] sm:$0xff]
          %v1462 = vld [vmem:[%s368 + $0x78] sm:$0xff]
          %v1463 = vld [vmem:[%s368 + $0x80] sm:$0xff]
          %v1464 = vld [vmem:[%s368 + $0x88] sm:$0xff]
          %v1465 = vld [vmem:[%s368 + $0x90] sm:$0xff]
          %v1466 = vld [vmem:[%s368 + $0x98] sm:$0xff]
          %v1467 = vld [vmem:[%s368 + $0xa0] sm:$0xff]
          %v1468 = vld [vmem:[%s368 + $0xa8] sm:$0xff]
          %v1469 = vld [vmem:[%s368 + $0xb0] sm:$0xff]
          %v1470 = vld [vmem:[%s368 + $0xb8] sm:$0xff]
          %v1471 = vld [vmem:[%s368 + $0xc0] sm:$0xff]
          %v1472 = vld [vmem:[%s368 + $0xc8] sm:$0xff]
          %v1473 = vld [vmem:[%s368 + $0xd0] sm:$0xff]
          %v1474 = vld [vmem:[%s368 + $0xd8] sm:$0xff]
          %v1475 = vld [vmem:[%s368 + $0xe0] sm:$0xff]
          %v1476 = vld [vmem:[%s368 + $0xe8] sm:$0xff]
          %v1477 = vld [vmem:[%s368 + $0xf0] sm:$0xff]
          %v1478 = vld [vmem:[%s368 + $0xf8] sm:$0xff]
          %v1479 = vld [vmem:[%s5] sm:$0xff]
          %v1480 = vld [vmem:[%s5 + $0x8] sm:$0xff]
          %v1482 = vsel %vm1153, %v1447, 0
          %v1485 = vsel %vm1153, %v1448, 0
          %v1488 = vsel %vm1153, %v1449, 0
          %v1491 = vsel %vm1153, %v1450, 0
          %v1494 = vsel %vm1153, %v1451, 0
          %v1497 = vsel %vm1153, %v1452, 0
          %v1500 = vsel %vm1153, %v1453, 0
          %v1503 = vsel %vm1153, %v1454, 0
          %v1506 = vsel %vm1153, %v1455, 0
          %v1509 = vsel %vm1153, %v1456, 0
          %v1512 = vsel %vm1153, %v1457, 0
          %v1515 = vsel %vm1153, %v1458, 0
          %v1518 = vsel %vm1153, %v1459, 0
          %v1521 = vsel %vm1153, %v1460, 0
          %v1524 = vsel %vm1153, %v1461, 0
          %v1527 = vsel %vm1153, %v1462, 0
          %v1530 = vsel %vm1153, %v1463, 0
          %v1533 = vsel %vm1153, %v1464, 0
          %v1536 = vsel %vm1153, %v1465, 0
          %v1539 = vsel %vm1153, %v1466, 0
          %v1542 = vsel %vm1153, %v1467, 0
          %v1545 = vsel %vm1153, %v1468, 0
          %v1548 = vsel %vm1153, %v1469, 0
          %v1551 = vsel %vm1153, %v1470, 0
          %v1554 = vsel %vm1153, %v1471, 0
          %v1557 = vsel %vm1153, %v1472, 0
          %v1560 = vsel %vm1153, %v1473, 0
          %v1563 = vsel %vm1153, %v1474, 0
          %v1566 = vsel %vm1153, %v1475, 0
          %v1569 = vsel %vm1153, %v1476, 0
          %v1572 = vsel %vm1153, %v1477, 0
          %v1575 = vsel %vm1153, %v1478, 0
          %1577 = vmatprep.subr.mxu0 0.0
          %1578 = vmatpush1.msra.mxu0 %v1479
          %1579 = vmatprep.subr.mxu0 0.0
          %1580 = vmatpush1.msra.mxu0 %v1480
          %1581 = vmatprep.subr.mxu0 0.0
          %1582 = vmatpush1.msra.mxu0 0.0
          %1583 = vmatprep.subr.mxu0 0.0
          %1584 = vmatpush1.msra.mxu0 0.0
          %1585 = vmatprep.subr.mxu0 0.0
          %1586 = vmatpush1.msra.mxu0 0.0
          %1587 = vmatprep.subr.mxu0 0.0
          %1588 = vmatpush1.msra.mxu0 0.0
          %1589 = vmatprep.subr.mxu0 0.0
          %1590 = vmatpush1.msra.mxu0 0.0
          %1591 = vmatprep.subr.mxu0 0.0
          %1592 = vmatpush1.msra.mxu0 0.0
          %1593 = vmatprep.subr.mxu0 0.0
          %1594 = vmatpush1.msra.mxu0 0.0
          %1595 = vmatprep.subr.mxu0 0.0
          %1596 = vmatpush1.msra.mxu0 0.0
          %1597 = vmatprep.subr.mxu0 0.0
          %1598 = vmatpush1.msra.mxu0 0.0
          %1599 = vmatprep.subr.mxu0 0.0
          %1600 = vmatpush1.msra.mxu0 0.0
          %1601 = vmatprep.subr.mxu0 0.0
          %1602 = vmatpush1.msra.mxu0 0.0
          %1603 = vmatprep.subr.mxu0 0.0
          %1604 = vmatpush1.msra.mxu0 0.0
          %1605 = vmatprep.subr.mxu0 0.0
          %1606 = vmatpush1.msra.mxu0 0.0
          %1607 = vmatprep.subr.mxu0 0.0
          %1608 = vmatpush1.msra.mxu0 0.0
          %1609 = vmatprep.subr.mxu0 0.0
          %1610 = vmatpush1.msra.mxu0 0.0
          %1611 = vmatprep.subr.mxu0 0.0
          %1612 = vmatpush1.msra.mxu0 0.0
          %1613 = vmatprep.subr.mxu0 0.0
          %1614 = vmatpush1.msra.mxu0 0.0
          %1615 = vmatprep.subr.mxu0 0.0
          %1616 = vmatpush1.msra.mxu0 0.0
          %1617 = vmatprep.subr.mxu0 0.0
          %1618 = vmatpush1.msra.mxu0 0.0
          %1619 = vmatprep.subr.mxu0 0.0
          %1620 = vmatpush1.msra.mxu0 0.0
          %1621 = vmatprep.subr.mxu0 0.0
          %1622 = vmatpush1.msra.mxu0 0.0
          %1623 = vmatprep.subr.mxu0 0.0
          %1624 = vmatpush1.msra.mxu0 0.0
          %1625 = vmatprep.subr.mxu0 0.0
          %1626 = vmatpush1.msra.mxu0 0.0
          %1627 = vmatprep.subr.mxu0 0.0
          %1628 = vmatpush1.msra.mxu0 0.0
          %1629 = vmatprep.subr.mxu0 0.0
          %1630 = vmatpush1.msra.mxu0 0.0
          %1631 = vmatprep.subr.mxu0 0.0
          %1632 = vmatpush1.msra.mxu0 0.0
          %1633 = vmatprep.subr.mxu0 0.0
          %1634 = vmatpush1.msra.mxu0 0.0
          %1635 = vmatprep.subr.mxu0 0.0
          %1636 = vmatpush1.msra.mxu0 0.0
          %1637 = vmatprep.subr.mxu0 0.0
          %1638 = vmatpush1.msra.mxu0 0.0
          %1639 = vmatprep.subr.mxu0 0.0
          %1640 = vmatpush1.msra.mxu0 0.0
          %1641 = vmatprep.mubr.f32.mxu0 0.0
          %1642 = vmatmul.mubr.f32.gmra.mrb[0].mxu0 %v1482
          %v1643 = vpop.f32.mrb[0].mxu0
          %v1644 = vadd.f32 0.0, %v1643
          %v1645 = vpop.f32.mrb[0].mxu0
          %1646 = vmatprep.mubr.f32.mxu0 0.0
          %1647 = vmatmul.mubr.f32.gmra.mrb[0].mxu0 %v1485
          %v1648 = vpop.f32.mrb[0].mxu0
          %v1649 = vadd.f32 0.0, %v1648
          %v1650 = vpop.f32.mrb[0].mxu0
          %1651 = vmatprep.mubr.f32.mxu0 0.0
          %1652 = vmatmul.mubr.f32.gmra.mrb[0].mxu0 %v1488
          %v1653 = vpop.f32.mrb[0].mxu0
          %v1654 = vadd.f32 0.0, %v1653
          %v1655 = vpop.f32.mrb[0].mxu0
          %1656 = vmatprep.mubr.f32.mxu0 0.0
          %1657 = vmatmul.mubr.f32.gmra.mrb[0].mxu0 %v1491
          %v1658 = vpop.f32.mrb[0].mxu0
          %v1659 = vadd.f32 0.0, %v1658
          %v1660 = vpop.f32.mrb[0].mxu0
          %1661 = vmatprep.mubr.f32.mxu0 0.0
          %1662 = vmatmul.mubr.f32.gmra.mrb[0].mxu0 %v1494
          %v1663 = vpop.f32.mrb[0].mxu0
          %v1664 = vadd.f32 0.0, %v1663
          %v1665 = vpop.f32.mrb[0].mxu0
          %1666 = vmatprep.mubr.f32.mxu0 0.0
          %1667 = vmatmul.mubr.f32.gmra.mrb[0].mxu0 %v1497
          %v1668 = vpop.f32.mrb[0].mxu0
          %v1669 = vadd.f32 0.0, %v1668
          %v1670 = vpop.f32.mrb[0].mxu0
          %1671 = vmatprep.mubr.f32.mxu0 0.0
          %1672 = vmatmul.mubr.f32.gmra.mrb[0].mxu0 %v1500
          %v1673 = vpop.f32.mrb[0].mxu0
          %v1674 = vadd.f32 0.0, %v1673
          %v1675 = vpop.f32.mrb[0].mxu0
          %1676 = vmatprep.mubr.f32.mxu0 0.0
          %1677 = vmatmul.mubr.f32.gmra.mrb[0].mxu0 %v1503
          %v1678 = vpop.f32.mrb[0].mxu0
          %v1679 = vadd.f32 0.0, %v1678
          %v1680 = vpop.f32.mrb[0].mxu0
          %1681 = vmatprep.mubr.f32.mxu0 0.0
          %1682 = vmatmul.mubr.f32.gmra.mrb[0].mxu0 %v1506
          %v1683 = vpop.f32.mrb[0].mxu0
          %v1684 = vadd.f32 0.0, %v1683
          %v1685 = vpop.f32.mrb[0].mxu0
          %1686 = vmatprep.mubr.f32.mxu0 0.0
          %1687 = vmatmul.mubr.f32.gmra.mrb[0].mxu0 %v1509
          %v1688 = vpop.f32.mrb[0].mxu0
          %v1689 = vadd.f32 0.0, %v1688
          %v1690 = vpop.f32.mrb[0].mxu0
          %1691 = vmatprep.mubr.f32.mxu0 0.0
          %1692 = vmatmul.mubr.f32.gmra.mrb[0].mxu0 %v1512
          %v1693 = vpop.f32.mrb[0].mxu0
          %v1694 = vadd.f32 0.0, %v1693
          %v1695 = vpop.f32.mrb[0].mxu0
          %1696 = vmatprep.mubr.f32.mxu0 0.0
          %1697 = vmatmul.mubr.f32.gmra.mrb[0].mxu0 %v1515
          %v1698 = vpop.f32.mrb[0].mxu0
          %v1699 = vadd.f32 0.0, %v1698
          %v1700 = vpop.f32.mrb[0].mxu0
          %1701 = vmatprep.mubr.f32.mxu0 0.0
          %1702 = vmatmul.mubr.f32.gmra.mrb[0].mxu0 %v1518
          %v1703 = vpop.f32.mrb[0].mxu0
          %v1704 = vadd.f32 0.0, %v1703
          %v1705 = vpop.f32.mrb[0].mxu0
          %1706 = vmatprep.mubr.f32.mxu0 0.0
          %1707 = vmatmul.mubr.f32.gmra.mrb[0].mxu0 %v1521
          %v1708 = vpop.f32.mrb[0].mxu0
          %v1709 = vadd.f32 0.0, %v1708
          %v1710 = vpop.f32.mrb[0].mxu0
          %1711 = vmatprep.mubr.f32.mxu0 0.0
          %1712 = vmatmul.mubr.f32.gmra.mrb[0].mxu0 %v1524
          %v1713 = vpop.f32.mrb[0].mxu0
          %v1714 = vadd.f32 0.0, %v1713
          %v1715 = vpop.f32.mrb[0].mxu0
          %1716 = vmatprep.mubr.f32.mxu0 0.0
          %1717 = vmatmul.mubr.f32.gmra.mrb[0].mxu0 %v1527
          %v1718 = vpop.f32.mrb[0].mxu0
          %v1719 = vadd.f32 0.0, %v1718
          %v1720 = vpop.f32.mrb[0].mxu0
          %1721 = vmatprep.mubr.f32.mxu0 0.0
          %1722 = vmatmul.mubr.f32.gmra.mrb[0].mxu0 %v1530
          %v1723 = vpop.f32.mrb[0].mxu0
          %v1724 = vadd.f32 0.0, %v1723
          %v1725 = vpop.f32.mrb[0].mxu0
          %1726 = vmatprep.mubr.f32.mxu0 0.0
          %1727 = vmatmul.mubr.f32.gmra.mrb[0].mxu0 %v1533
          %v1728 = vpop.f32.mrb[0].mxu0
          %v1729 = vadd.f32 0.0, %v1728
          %v1730 = vpop.f32.mrb[0].mxu0
          %1731 = vmatprep.mubr.f32.mxu0 0.0
          %1732 = vmatmul.mubr.f32.gmra.mrb[0].mxu0 %v1536
          %v1733 = vpop.f32.mrb[0].mxu0
          %v1734 = vadd.f32 0.0, %v1733
          %v1735 = vpop.f32.mrb[0].mxu0
          %1736 = vmatprep.mubr.f32.mxu0 0.0
          %1737 = vmatmul.mubr.f32.gmra.mrb[0].mxu0 %v1539
          %v1738 = vpop.f32.mrb[0].mxu0
          %v1739 = vadd.f32 0.0, %v1738
          %v1740 = vpop.f32.mrb[0].mxu0
          %1741 = vmatprep.mubr.f32.mxu0 0.0
          %1742 = vmatmul.mubr.f32.gmra.mrb[0].mxu0 %v1542
          %v1743 = vpop.f32.mrb[0].mxu0
          %v1744 = vadd.f32 0.0, %v1743
          %v1745 = vpop.f32.mrb[0].mxu0
          %1746 = vmatprep.mubr.f32.mxu0 0.0
          %1747 = vmatmul.mubr.f32.gmra.mrb[0].mxu0 %v1545
          %v1748 = vpop.f32.mrb[0].mxu0
          %v1749 = vadd.f32 0.0, %v1748
          %v1750 = vpop.f32.mrb[0].mxu0
          %1751 = vmatprep.mubr.f32.mxu0 0.0
          %1752 = vmatmul.mubr.f32.gmra.mrb[0].mxu0 %v1548
          %v1753 = vpop.f32.mrb[0].mxu0
          %v1754 = vadd.f32 0.0, %v1753
          %v1755 = vpop.f32.mrb[0].mxu0
          %1756 = vmatprep.mubr.f32.mxu0 0.0
          %1757 = vmatmul.mubr.f32.gmra.mrb[0].mxu0 %v1551
          %v1758 = vpop.f32.mrb[0].mxu0
          %v1759 = vadd.f32 0.0, %v1758
          %v1760 = vpop.f32.mrb[0].mxu0
          %1761 = vmatprep.mubr.f32.mxu0 0.0
          %1762 = vmatmul.mubr.f32.gmra.mrb[0].mxu0 %v1554
          %v1763 = vpop.f32.mrb[0].mxu0
          %v1764 = vadd.f32 0.0, %v1763
          %v1765 = vpop.f32.mrb[0].mxu0
          %1766 = vmatprep.mubr.f32.mxu0 0.0
          %1767 = vmatmul.mubr.f32.gmra.mrb[0].mxu0 %v1557
          %v1768 = vpop.f32.mrb[0].mxu0
          %v1769 = vadd.f32 0.0, %v1768
          %v1770 = vpop.f32.mrb[0].mxu0
          %1771 = vmatprep.mubr.f32.mxu0 0.0
          %1772 = vmatmul.mubr.f32.gmra.mrb[0].mxu0 %v1560
          %v1773 = vpop.f32.mrb[0].mxu0
          %v1774 = vadd.f32 0.0, %v1773
          %v1775 = vpop.f32.mrb[0].mxu0
          %1776 = vmatprep.mubr.f32.mxu0 0.0
          %1777 = vmatmul.mubr.f32.gmra.mrb[0].mxu0 %v1563
          %v1778 = vpop.f32.mrb[0].mxu0
          %v1779 = vadd.f32 0.0, %v1778
          %v1780 = vpop.f32.mrb[0].mxu0
          %1781 = vmatprep.mubr.f32.mxu0 0.0
          %1782 = vmatmul.mubr.f32.gmra.mrb[0].mxu0 %v1566
          %v1783 = vpop.f32.mrb[0].mxu0
          %v1784 = vadd.f32 0.0, %v1783
          %v1785 = vpop.f32.mrb[0].mxu0
          %1786 = vmatprep.mubr.f32.mxu0 0.0
          %1787 = vmatmul.mubr.f32.gmra.mrb[0].mxu0 %v1569
          %v1788 = vpop.f32.mrb[0].mxu0
          %v1789 = vadd.f32 0.0, %v1788
          %v1790 = vpop.f32.mrb[0].mxu0
          %1791 = vmatprep.mubr.f32.mxu0 0.0
          %1792 = vmatmul.mubr.f32.gmra.mrb[0].mxu0 %v1572
          %v1793 = vpop.f32.mrb[0].mxu0
          %v1794 = vadd.f32 0.0, %v1793
          %v1795 = vpop.f32.mrb[0].mxu0
          %1796 = vmatprep.mubr.f32.mxu0 0.0
          %1797 = vmatmul.mubr.f32.gmra.mrb[0].mxu0 %v1575
          %v1798 = vpop.f32.mrb[0].mxu0
          %v1799 = vadd.f32 0.0, %v1798
          %v1800 = vpop.f32.mrb[0].mxu0
          %1801 = vdwg.mxu0
          %v1803 = vsel %vm1153, %v1413, 0
          %v1806 = vsel %vm1153, %v1414, 0
          %v1809 = vsel %vm1153, %v1415, 0
          %v1812 = vsel %vm1153, %v1416, 0
          %v1815 = vsel %vm1153, %v1417, 0
          %v1818 = vsel %vm1153, %v1418, 0
          %v1821 = vsel %vm1153, %v1419, 0
          %v1824 = vsel %vm1153, %v1420, 0
          %v1827 = vsel %vm1153, %v1421, 0
          %v1830 = vsel %vm1153, %v1422, 0
          %v1833 = vsel %vm1153, %v1423, 0
          %v1836 = vsel %vm1153, %v1424, 0
          %v1839 = vsel %vm1153, %v1425, 0
          %v1842 = vsel %vm1153, %v1426, 0
          %v1845 = vsel %vm1153, %v1427, 0
          %v1848 = vsel %vm1153, %v1428, 0
          %v1851 = vsel %vm1153, %v1429, 0
          %v1854 = vsel %vm1153, %v1430, 0
          %v1857 = vsel %vm1153, %v1431, 0
          %v1860 = vsel %vm1153, %v1432, 0
          %v1863 = vsel %vm1153, %v1433, 0
          %v1866 = vsel %vm1153, %v1434, 0
          %v1869 = vsel %vm1153, %v1435, 0
          %v1872 = vsel %vm1153, %v1436, 0
          %v1875 = vsel %vm1153, %v1437, 0
          %v1878 = vsel %vm1153, %v1438, 0
          %v1881 = vsel %vm1153, %v1439, 0
          %v1884 = vsel %vm1153, %v1440, 0
          %v1887 = vsel %vm1153, %v1441, 0
          %v1890 = vsel %vm1153, %v1442, 0
          %v1893 = vsel %vm1153, %v1443, 0
          %v1896 = vsel %vm1153, %v1444, 0
          %1898 = vmatprep.subr.mxu0 0.0
          %1899 = vmatpush1.msra.mxu0 %v1445
          %1900 = vmatprep.subr.mxu0 0.0
          %1901 = vmatpush1.msra.mxu0 %v1446
          %1902 = vmatprep.subr.mxu0 0.0
          %1903 = vmatpush1.msra.mxu0 0.0
          %1904 = vmatprep.subr.mxu0 0.0
          %1905 = vmatpush1.msra.mxu0 0.0
          %1906 = vmatprep.subr.mxu0 0.0
          %1907 = vmatpush1.msra.mxu0 0.0
          %1908 = vmatprep.subr.mxu0 0.0
          %1909 = vmatpush1.msra.mxu0 0.0
          %1910 = vmatprep.subr.mxu0 0.0
          %1911 = vmatpush1.msra.mxu0 0.0
          %1912 = vmatprep.subr.mxu0 0.0
          %1913 = vmatpush1.msra.mxu0 0.0
          %1914 = vmatprep.subr.mxu0 0.0
          %1915 = vmatpush1.msra.mxu0 0.0
          %1916 = vmatprep.subr.mxu0 0.0
          %1917 = vmatpush1.msra.mxu0 0.0
          %1918 = vmatprep.subr.mxu0 0.0
          %1919 = vmatpush1.msra.mxu0 0.0
          %1920 = vmatprep.subr.mxu0 0.0
          %1921 = vmatpush1.msra.mxu0 0.0
          %1922 = vmatprep.subr.mxu0 0.0
          %1923 = vmatpush1.msra.mxu0 0.0
          %1924 = vmatprep.subr.mxu0 0.0
          %1925 = vmatpush1.msra.mxu0 0.0
          %1926 = vmatprep.subr.mxu0 0.0
          %1927 = vmatpush1.msra.mxu0 0.0
          %1928 = vmatprep.subr.mxu0 0.0
          %1929 = vmatpush1.msra.mxu0 0.0
          %1930 = vmatprep.subr.mxu0 0.0
          %1931 = vmatpush1.msra.mxu0 0.0
          %1932 = vmatprep.subr.mxu0 0.0
          %1933 = vmatpush1.msra.mxu0 0.0
          %1934 = vmatprep.subr.mxu0 0.0
          %1935 = vmatpush1.msra.mxu0 0.0
          %1936 = vmatprep.subr.mxu0 0.0
          %1937 = vmatpush1.msra.mxu0 0.0
          %1938 = vmatprep.subr.mxu0 0.0
          %1939 = vmatpush1.msra.mxu0 0.0
          %1940 = vmatprep.subr.mxu0 0.0
          %1941 = vmatpush1.msra.mxu0 0.0
          %1942 = vmatprep.subr.mxu0 0.0
          %1943 = vmatpush1.msra.mxu0 0.0
          %1944 = vmatprep.subr.mxu0 0.0
          %1945 = vmatpush1.msra.mxu0 0.0
          %1946 = vmatprep.subr.mxu0 0.0
          %1947 = vmatpush1.msra.mxu0 0.0
          %1948 = vmatprep.subr.mxu0 0.0
          %1949 = vmatpush1.msra.mxu0 0.0
          %1950 = vmatprep.subr.mxu0 0.0
          %1951 = vmatpush1.msra.mxu0 0.0
          %1952 = vmatprep.subr.mxu0 0.0
          %1953 = vmatpush1.msra.mxu0 0.0
          %1954 = vmatprep.subr.mxu0 0.0
          %1955 = vmatpush1.msra.mxu0 0.0
          %1956 = vmatprep.subr.mxu0 0.0
          %1957 = vmatpush1.msra.mxu0 0.0
          %1958 = vmatprep.subr.mxu0 0.0
          %1959 = vmatpush1.msra.mxu0 0.0
          %1960 = vmatprep.subr.mxu0 0.0
          %1961 = vmatpush1.msra.mxu0 0.0
          %1962 = vmatprep.mubr.f32.mxu0 0.0
          %1963 = vmatmul.mubr.f32.gmra.mrb[0].mxu0 %v1803
          %v1964 = vpop.f32.mrb[0].mxu0
          %v1965 = vadd.f32 %v1644, %v1964
          %v1966 = vpop.f32.mrb[0].mxu0
          %1967 = vmatprep.mubr.f32.mxu0 0.0
          %1968 = vmatmul.mubr.f32.gmra.mrb[0].mxu0 %v1806
          %v1969 = vpop.f32.mrb[0].mxu0
          %v1970 = vadd.f32 %v1649, %v1969
          %v1971 = vpop.f32.mrb[0].mxu0
          %1972 = vmatprep.mubr.f32.mxu0 0.0
          %1973 = vmatmul.mubr.f32.gmra.mrb[0].mxu0 %v1809
          %v1974 = vpop.f32.mrb[0].mxu0
          %v1975 = vadd.f32 %v1654, %v1974
          %v1976 = vpop.f32.mrb[0].mxu0
          %1977 = vmatprep.mubr.f32.mxu0 0.0
          %1978 = vmatmul.mubr.f32.gmra.mrb[0].mxu0 %v1812
          %v1979 = vpop.f32.mrb[0].mxu0
          %v1980 = vadd.f32 %v1659, %v1979
          %v1981 = vpop.f32.mrb[0].mxu0
          %1982 = vmatprep.mubr.f32.mxu0 0.0
          %1983 = vmatmul.mubr.f32.gmra.mrb[0].mxu0 %v1815
          %v1984 = vpop.f32.mrb[0].mxu0
          %v1985 = vadd.f32 %v1664, %v1984
          %v1986 = vpop.f32.mrb[0].mxu0
          %1987 = vmatprep.mubr.f32.mxu0 0.0
          %1988 = vmatmul.mubr.f32.gmra.mrb[0].mxu0 %v1818
          %v1989 = vpop.f32.mrb[0].mxu0
          %v1990 = vadd.f32 %v1669, %v1989
          %v1991 = vpop.f32.mrb[0].mxu0
          %1992 = vmatprep.mubr.f32.mxu0 0.0
          %1993 = vmatmul.mubr.f32.gmra.mrb[0].mxu0 %v1821
          %v1994 = vpop.f32.mrb[0].mxu0
          %v1995 = vadd.f32 %v1674, %v1994
          %v1996 = vpop.f32.mrb[0].mxu0
          %1997 = vmatprep.mubr.f32.mxu0 0.0
          %1998 = vmatmul.mubr.f32.gmra.mrb[0].mxu0 %v1824
          %v1999 = vpop.f32.mrb[0].mxu0
          %v2000 = vadd.f32 %v1679, %v1999
          %v2001 = vpop.f32.mrb[0].mxu0
          %2002 = vmatprep.mubr.f32.mxu0 0.0
          %2003 = vmatmul.mubr.f32.gmra.mrb[0].mxu0 %v1827
          %v2004 = vpop.f32.mrb[0].mxu0
          %v2005 = vadd.f32 %v1684, %v2004
          %v2006 = vpop.f32.mrb[0].mxu0
          %2007 = vmatprep.mubr.f32.mxu0 0.0
          %2008 = vmatmul.mubr.f32.gmra.mrb[0].mxu0 %v1830
          %v2009 = vpop.f32.mrb[0].mxu0
          %v2010 = vadd.f32 %v1689, %v2009
          %v2011 = vpop.f32.mrb[0].mxu0
          %2012 = vmatprep.mubr.f32.mxu0 0.0
          %2013 = vmatmul.mubr.f32.gmra.mrb[0].mxu0 %v1833
          %v2014 = vpop.f32.mrb[0].mxu0
          %v2015 = vadd.f32 %v1694, %v2014
          %v2016 = vpop.f32.mrb[0].mxu0
          %2017 = vmatprep.mubr.f32.mxu0 0.0
          %2018 = vmatmul.mubr.f32.gmra.mrb[0].mxu0 %v1836
          %v2019 = vpop.f32.mrb[0].mxu0
          %v2020 = vadd.f32 %v1699, %v2019
          %v2021 = vpop.f32.mrb[0].mxu0
          %2022 = vmatprep.mubr.f32.mxu0 0.0
          %2023 = vmatmul.mubr.f32.gmra.mrb[0].mxu0 %v1839
          %v2024 = vpop.f32.mrb[0].mxu0
          %v2025 = vadd.f32 %v1704, %v2024
          %v2026 = vpop.f32.mrb[0].mxu0
          %2027 = vmatprep.mubr.f32.mxu0 0.0
          %2028 = vmatmul.mubr.f32.gmra.mrb[0].mxu0 %v1842
          %v2029 = vpop.f32.mrb[0].mxu0
          %v2030 = vadd.f32 %v1709, %v2029
          %v2031 = vpop.f32.mrb[0].mxu0
          %2032 = vmatprep.mubr.f32.mxu0 0.0
          %2033 = vmatmul.mubr.f32.gmra.mrb[0].mxu0 %v1845
          %v2034 = vpop.f32.mrb[0].mxu0
          %v2035 = vadd.f32 %v1714, %v2034
          %v2036 = vpop.f32.mrb[0].mxu0
          %2037 = vmatprep.mubr.f32.mxu0 0.0
          %2038 = vmatmul.mubr.f32.gmra.mrb[0].mxu0 %v1848
          %v2039 = vpop.f32.mrb[0].mxu0
          %v2040 = vadd.f32 %v1719, %v2039
          %v2041 = vpop.f32.mrb[0].mxu0
          %2042 = vmatprep.mubr.f32.mxu0 0.0
          %2043 = vmatmul.mubr.f32.gmra.mrb[0].mxu0 %v1851
          %v2044 = vpop.f32.mrb[0].mxu0
          %v2045 = vadd.f32 %v1724, %v2044
          %v2046 = vpop.f32.mrb[0].mxu0
          %2047 = vmatprep.mubr.f32.mxu0 0.0
          %2048 = vmatmul.mubr.f32.gmra.mrb[0].mxu0 %v1854
          %v2049 = vpop.f32.mrb[0].mxu0
          %v2050 = vadd.f32 %v1729, %v2049
          %v2051 = vpop.f32.mrb[0].mxu0
          %2052 = vmatprep.mubr.f32.mxu0 0.0
          %2053 = vmatmul.mubr.f32.gmra.mrb[0].mxu0 %v1857
          %v2054 = vpop.f32.mrb[0].mxu0
          %v2055 = vadd.f32 %v1734, %v2054
          %v2056 = vpop.f32.mrb[0].mxu0
          %2057 = vmatprep.mubr.f32.mxu0 0.0
          %2058 = vmatmul.mubr.f32.gmra.mrb[0].mxu0 %v1860
          %v2059 = vpop.f32.mrb[0].mxu0
          %v2060 = vadd.f32 %v1739, %v2059
          %v2061 = vpop.f32.mrb[0].mxu0
          %2062 = vmatprep.mubr.f32.mxu0 0.0
          %2063 = vmatmul.mubr.f32.gmra.mrb[0].mxu0 %v1863
          %v2064 = vpop.f32.mrb[0].mxu0
          %v2065 = vadd.f32 %v1744, %v2064
          %v2066 = vpop.f32.mrb[0].mxu0
          %2067 = vmatprep.mubr.f32.mxu0 0.0
          %2068 = vmatmul.mubr.f32.gmra.mrb[0].mxu0 %v1866
          %v2069 = vpop.f32.mrb[0].mxu0
          %v2070 = vadd.f32 %v1749, %v2069
          %v2071 = vpop.f32.mrb[0].mxu0
          %2072 = vmatprep.mubr.f32.mxu0 0.0
          %2073 = vmatmul.mubr.f32.gmra.mrb[0].mxu0 %v1869
          %v2074 = vpop.f32.mrb[0].mxu0
          %v2075 = vadd.f32 %v1754, %v2074
          %v2076 = vpop.f32.mrb[0].mxu0
          %2077 = vmatprep.mubr.f32.mxu0 0.0
          %2078 = vmatmul.mubr.f32.gmra.mrb[0].mxu0 %v1872
          %v2079 = vpop.f32.mrb[0].mxu0
          %v2080 = vadd.f32 %v1759, %v2079
          %v2081 = vpop.f32.mrb[0].mxu0
          %2082 = vmatprep.mubr.f32.mxu0 0.0
          %2083 = vmatmul.mubr.f32.gmra.mrb[0].mxu0 %v1875
          %v2084 = vpop.f32.mrb[0].mxu0
          %v2085 = vadd.f32 %v1764, %v2084
          %v2086 = vpop.f32.mrb[0].mxu0
          %2087 = vmatprep.mubr.f32.mxu0 0.0
          %2088 = vmatmul.mubr.f32.gmra.mrb[0].mxu0 %v1878
          %v2089 = vpop.f32.mrb[0].mxu0
          %v2090 = vadd.f32 %v1769, %v2089
          %v2091 = vpop.f32.mrb[0].mxu0
          %2092 = vmatprep.mubr.f32.mxu0 0.0
          %2093 = vmatmul.mubr.f32.gmra.mrb[0].mxu0 %v1881
          %v2094 = vpop.f32.mrb[0].mxu0
          %v2095 = vadd.f32 %v1774, %v2094
          %v2096 = vpop.f32.mrb[0].mxu0
          %2097 = vmatprep.mubr.f32.mxu0 0.0
          %2098 = vmatmul.mubr.f32.gmra.mrb[0].mxu0 %v1884
          %v2099 = vpop.f32.mrb[0].mxu0
          %v2100 = vadd.f32 %v1779, %v2099
          %v2101 = vpop.f32.mrb[0].mxu0
          %2102 = vmatprep.mubr.f32.mxu0 0.0
          %2103 = vmatmul.mubr.f32.gmra.mrb[0].mxu0 %v1887
          %v2104 = vpop.f32.mrb[0].mxu0
          %v2105 = vadd.f32 %v1784, %v2104
          %v2106 = vpop.f32.mrb[0].mxu0
          %2107 = vmatprep.mubr.f32.mxu0 0.0
          %2108 = vmatmul.mubr.f32.gmra.mrb[0].mxu0 %v1890
          %v2109 = vpop.f32.mrb[0].mxu0
          %v2110 = vadd.f32 %v1789, %v2109
          %v2111 = vpop.f32.mrb[0].mxu0
          %2112 = vmatprep.mubr.f32.mxu0 0.0
          %2113 = vmatmul.mubr.f32.gmra.mrb[0].mxu0 %v1893
          %v2114 = vpop.f32.mrb[0].mxu0
          %v2115 = vadd.f32 %v1794, %v2114
          %v2116 = vpop.f32.mrb[0].mxu0
          %2117 = vmatprep.mubr.f32.mxu0 0.0
          %2118 = vmatmul.mubr.f32.gmra.mrb[0].mxu0 %v1896
          %v2119 = vpop.f32.mrb[0].mxu0
          %v2120 = vadd.f32 %v1799, %v2119
          %v2121 = vpop.f32.mrb[0].mxu0
          %2122 = vdwg.mxu0
          %v2123 = vld [vmem:[%s6] sm:$0x1]
          %v2125 = vlaneseq
          %v2126 = vshrl.u32 %v2125, 7
          %v2127 = vsub.s32 0, %v2126
          %v2128 = vrot.slane %v2123, %v2127
          %v2130 = vadd.f32 %v1965, %v2128
          %v2131 = vadd.f32 %v1970, %v2128
          %v2132 = vadd.f32 %v1975, %v2128
          %v2133 = vadd.f32 %v1980, %v2128
          %v2134 = vadd.f32 %v1985, %v2128
          %v2135 = vadd.f32 %v1990, %v2128
          %v2136 = vadd.f32 %v1995, %v2128
          %v2137 = vadd.f32 %v2000, %v2128
          %v2138 = vadd.f32 %v2005, %v2128
          %v2139 = vadd.f32 %v2010, %v2128
          %v2140 = vadd.f32 %v2015, %v2128
          %v2141 = vadd.f32 %v2020, %v2128
          %v2142 = vadd.f32 %v2025, %v2128
          %v2143 = vadd.f32 %v2030, %v2128
          %v2144 = vadd.f32 %v2035, %v2128
          %v2145 = vadd.f32 %v2040, %v2128
          %v2146 = vadd.f32 %v2045, %v2128
          %v2147 = vadd.f32 %v2050, %v2128
          %v2148 = vadd.f32 %v2055, %v2128
          %v2149 = vadd.f32 %v2060, %v2128
          %v2150 = vadd.f32 %v2065, %v2128
          %v2151 = vadd.f32 %v2070, %v2128
          %v2152 = vadd.f32 %v2075, %v2128
          %v2153 = vadd.f32 %v2080, %v2128
          %v2154 = vadd.f32 %v2085, %v2128
          %v2155 = vadd.f32 %v2090, %v2128
          %v2156 = vadd.f32 %v2095, %v2128
          %v2157 = vadd.f32 %v2100, %v2128
          %v2158 = vadd.f32 %v2105, %v2128
          %v2159 = vadd.f32 %v2110, %v2128
          %v2160 = vadd.f32 %v2115, %v2128
          %v2161 = vadd.f32 %v2120, %v2128
          %v2162 = vmax.f32 %v2130, 0.0
          %v2163 = vmax.f32 %v2131, 0.0
          %v2164 = vmax.f32 %v2132, 0.0
          %v2165 = vmax.f32 %v2133, 0.0
          %v2166 = vmax.f32 %v2134, 0.0
          %v2167 = vmax.f32 %v2135, 0.0
          %v2168 = vmax.f32 %v2136, 0.0
          %v2169 = vmax.f32 %v2137, 0.0
          %v2170 = vmax.f32 %v2138, 0.0
          %v2171 = vmax.f32 %v2139, 0.0
          %v2172 = vmax.f32 %v2140, 0.0
          %v2173 = vmax.f32 %v2141, 0.0
          %v2174 = vmax.f32 %v2142, 0.0
          %v2175 = vmax.f32 %v2143, 0.0
          %v2176 = vmax.f32 %v2144, 0.0
          %v2177 = vmax.f32 %v2145, 0.0
          %v2178 = vmax.f32 %v2146, 0.0
          %v2179 = vmax.f32 %v2147, 0.0
          %v2180 = vmax.f32 %v2148, 0.0
          %v2181 = vmax.f32 %v2149, 0.0
          %v2182 = vmax.f32 %v2150, 0.0
          %v2183 = vmax.f32 %v2151, 0.0
          %v2184 = vmax.f32 %v2152, 0.0
          %v2185 = vmax.f32 %v2153, 0.0
          %v2186 = vmax.f32 %v2154, 0.0
          %v2187 = vmax.f32 %v2155, 0.0
          %v2188 = vmax.f32 %v2156, 0.0
          %v2189 = vmax.f32 %v2157, 0.0
          %v2190 = vmax.f32 %v2158, 0.0
          %v2191 = vmax.f32 %v2159, 0.0
          %v2192 = vmax.f32 %v2160, 0.0
          %v2193 = vmax.f32 %v2161, 0.0
          %2194 = vst [vmem:[%s345] sm:$0xff] %v2162
          %2195 = vst [vmem:[%s345 + $0x8] sm:$0xff] %v2163
          %2196 = vst [vmem:[%s345 + $0x10] sm:$0xff] %v2164
          %2197 = vst [vmem:[%s345 + $0x18] sm:$0xff] %v2165
          %2198 = vst [vmem:[%s345 + $0x20] sm:$0xff] %v2166
          %2199 = vst [vmem:[%s345 + $0x28] sm:$0xff] %v2167
          %2200 = vst [vmem:[%s345 + $0x30] sm:$0xff] %v2168
          %2201 = vst [vmem:[%s345 + $0x38] sm:$0xff] %v2169
          %2202 = vst [vmem:[%s345 + $0x40] sm:$0xff] %v2170
          %2203 = vst [vmem:[%s345 + $0x48] sm:$0xff] %v2171
          %2204 = vst [vmem:[%s345 + $0x50] sm:$0xff] %v2172
          %2205 = vst [vmem:[%s345 + $0x58] sm:$0xff] %v2173
          %2206 = vst [vmem:[%s345 + $0x60] sm:$0xff] %v2174
          %2207 = vst [vmem:[%s345 + $0x68] sm:$0xff] %v2175
          %2208 = vst [vmem:[%s345 + $0x70] sm:$0xff] %v2176
          %2209 = vst [vmem:[%s345 + $0x78] sm:$0xff] %v2177
          %2210 = vst [vmem:[%s345 + $0x80] sm:$0xff] %v2178
          %2211 = vst [vmem:[%s345 + $0x88] sm:$0xff] %v2179
          %2212 = vst [vmem:[%s345 + $0x90] sm:$0xff] %v2180
          %2213 = vst [vmem:[%s345 + $0x98] sm:$0xff] %v2181
          %2214 = vst [vmem:[%s345 + $0xa0] sm:$0xff] %v2182
          %2215 = vst [vmem:[%s345 + $0xa8] sm:$0xff] %v2183
          %2216 = vst [vmem:[%s345 + $0xb0] sm:$0xff] %v2184
          %2217 = vst [vmem:[%s345 + $0xb8] sm:$0xff] %v2185
          %2218 = vst [vmem:[%s345 + $0xc0] sm:$0xff] %v2186
          %2219 = vst [vmem:[%s345 + $0xc8] sm:$0xff] %v2187
          %2220 = vst [vmem:[%s345 + $0xd0] sm:$0xff] %v2188
          %2221 = vst [vmem:[%s345 + $0xd8] sm:$0xff] %v2189
          %2222 = vst [vmem:[%s345 + $0xe0] sm:$0xff] %v2190
          %2223 = vst [vmem:[%s345 + $0xe8] sm:$0xff] %v2191
          %2224 = vst [vmem:[%s345 + $0xf0] sm:$0xff] %v2192
          %2225 = vst [vmem:[%s345 + $0xf8] sm:$0xff] %v2193
        $region56: #{tpu_custom_call.1} parent=47 // pred_fallthru
          _
        %s2226 = sand.u32 %s210, 1
        %s2227 = scalar_lea.sflag [#allocation4], %s2226
        %s2228 = sand.u32 %s210, 1
        %s2229 = smul.addr %s2228, 256
        %s2230 = scalar_lea.vmem [#allocation3], %s2229
        // Predicated region
        $region57: #{tpu_custom_call.1} parent=47 // pred_check
          %p2231 = pneg %p220
        $region58: #{tpu_custom_call.1} parent=47 // pred_check_branch
          %2233 = sbr.rel (%p2231) target = $region60
        $region59: #{tpu_custom_call.1} parent=47 // pred_region
          %s2234 = smul.u32 32, %s25
          %s2236 = ssub.s32 4096, 4096
          %2237 = vsyncadd %s2227, %s2236
          %s2238 = smul.addr %s2234, 128
          %s2239 = scalar_lea.hbm %s7, %s2238
          %s2240 = sshll.u32 %s2230, 4
          %s2241 = int_to_ptr.vmem [resolvable:$true] %s2240
          %2246 = dma.vmem_to_hbm [thread:$0]  %s2241, 4096, %s2239, %s2227, 128, 128, 8
        $region60: #{tpu_custom_call.1} parent=47 // pred_fallthru
          _
      $region48: #{tpu_custom_call.1} parent=5 // pred_fallthru
        _
      %p2247 = scmp.le.s32.totalorder 2, %s16
      // Predicated region
      $region61: #{tpu_custom_call.1} parent=5 // pred_check
        %p2248 = pneg %p2247
      $region62: #{tpu_custom_call.1} parent=5 // pred_check_branch
        %2250 = sbr.rel (%p2248) target = $region64
      $region63: #{tpu_custom_call.1} parent=5 // pred_region
        %s2251 = ssub.s32 %s16, 2
        // Predicated region
        $region65: #{tpu_custom_call.1} parent=63 // pred_check
          %p2252 = pneg %p226
        $region66: #{tpu_custom_call.1} parent=63 // pred_check_branch
          %2254 = sbr.rel (%p2252) target = $region68
        $region67: #{tpu_custom_call.1} parent=63 // pred_region
          %s2255 = sand.u32 %s211, 1
          %s2256 = scalar_lea.sflag [#allocation4], %s2255
          %s2257 = sand.u32 %s211, 1
          %s2258 = smul.addr %s2257, 256
          %s2259 = scalar_lea.vmem [#allocation3], %s2258
          %2260 = dma.done %s2256, 4096
        $region68: #{tpu_custom_call.1} parent=63 // pred_fallthru
          _
      $region64: #{tpu_custom_call.1} parent=5 // pred_fallthru
        _
    $region6: #{tpu_custom_call.1} parent=1 // loop_footer
      %s20 = sadd.s32 1, %s16
    $region7: #{tpu_custom_call.1} parent=1 // loop_footer_branch
      %15 = sbr.rel target = $region3
    $region8: #{tpu_custom_call.1} parent=1 // loop_exit
      _
    %2261 = vsyncpa [#allocation4], 1
    %s2262 = scalar_lea.sflag [#allocation4], 1
    %2263 = vsyncpa %s2262, 1

</llo_original>
